<compile_context>
chip_gen: v7x
topology: tpu7x:2x2x1
jax: 0.10.0
libtpu: 0.0.40
codegen_flags: <defaults>
</compile_context>

<pallas_src>
import jax
import jax.numpy as jnp
from jax.experimental import pallas as pl
from jax.experimental.pallas import tpu as pltpu

# ---- model dimensions (match the PyTorch module) ----
NUM_CHANNELS = 10
NUM_CLASSES = 53
K = 5                      # conv kernel size
PAD = 2                    # "same" padding for k=5
L_IN = 20                  # input length: 20 -> pool 10 -> pool 5 (matches Linear(64*5, 128))
C1, C2 = 32, 64
L2, L3 = L_IN // 2, L_IN // 4
HID = 128
BN_EPS = 1e-5

F_IN = NUM_CHANNELS * L_IN       # 200  flattened input features per sample (c-major, l-minor)
F_IN_PAD = 256                   # K-dim / lane aligned input features
P1 = L2 * C1                     # 320  real pooled-1 features (pos-major, chan-minor)
P2 = L3 * C2                     # 320  real pooled-2 features (pos-major, chan-minor)
HALF1 = 384                      # 128-aligned half width of conv1 output (pad of 320)
HALF2 = 384                      # 128-aligned half width of conv2 output (pad of 320)
F1P = 2 * HALF1                  # 768  padded conv1 output columns (parity, pos, chan)
F2P = 2 * HALF2                  # 768  padded conv2 output columns (parity, pos, chan)
OUT_PAD = 128                    # lane-padded class dim (>= NUM_CLASSES), full 128 lanes

# Set to jnp.bfloat16 on v6e/v7x for bf16 MXU/VPU (f32 accumulation is kept);
# keep f32 on v5e (no bf16 VPU) and for exact reference checks.
COMPUTE_DTYPE = jnp.float32


def emgcnn_kernel(x_ref,                                  # (TB, F_IN_PAD)
                  w1_ref, s1_ref, t1_ref,                 # (F_IN_PAD, F1P), (1, F1P), (1, F1P)
                  w2_ref, s2_ref, t2_ref,                 # (HALF1, F2P),   (1, F2P), (1, F2P)
                  fw1_ref, fb1_ref,                       # (HALF2, HID),   (1, HID)
                  fw2_ref, fb2_ref,                       # (HID, OUT_PAD), (1, OUT_PAD)
                  o_ref):                                 # (TB, OUT_PAD)
    cdt = w1_ref.dtype

    # ---- Conv1d(10->32, k=5, pad=2) as one banded matmul + folded BN + ReLU ----
    h1 = jnp.dot(x_ref[...], w1_ref[...], preferred_element_type=jnp.float32)
    h1 = jnp.maximum(h1 * s1_ref[...] + t1_ref[...], 0.0)            # (TB, 768)
    # MaxPool1d(2): even/odd output positions live in the two 384-wide halves
    # (vreg-aligned slices -> pure VPU max, no lane relayout).
    p1 = jnp.maximum(h1[:, :HALF1], h1[:, HALF1:]).astype(cdt)       # (TB, 384)

    # ---- Conv1d(32->64, k=5, pad=2) as one banded matmul + folded BN + ReLU ----
    h2 = jnp.dot(p1, w2_ref[...], preferred_element_type=jnp.float32)
    h2 = jnp.maximum(h2 * s2_ref[...] + t2_ref[...], 0.0)            # (TB, 768)
    p2 = jnp.maximum(h2[:, :HALF2], h2[:, HALF2:]).astype(cdt)       # (TB, 384)

    # ---- Flatten + Linear(320 -> 128) + ReLU ----
    h3 = jnp.dot(p2, fw1_ref[...], preferred_element_type=jnp.float32) + fb1_ref[...]
    h3 = jnp.maximum(h3, 0.0).astype(cdt)                            # (TB, 128)
    # Dropout(0.5) -> identity (eval mode).  # TODO(synk): training-mode dropout mask

    # ---- Linear(128 -> num_classes), lane-padded to OUT_PAD ----
    o_ref[...] = (jnp.dot(h3, fw2_ref[...], preferred_element_type=jnp.float32)
                  + fb2_ref[...]).astype(o_ref.dtype)


def _round_up(n, m):
    return ((n + m - 1) // m) * m


def _conv_band(w, l_len, row_lmajor, half_pad):
    """Dense banded matrix for 'same'-padded Conv1d.

    w: (Cout, Cin, K). Returns (Cin*l_len, 2*half_pad) matrix such that
    x_flat @ W reproduces the conv output with columns ordered
    (parity, out_pos//2, Cout) and each parity half zero-padded from
    (l_len//2)*Cout to half_pad columns -- i.e. the two MaxPool operands are
    the two contiguous 128-aligned halves of the output.
    Row order: c_in-major/l_in-minor if row_lmajor=False, else l_in-major.
    """
    cout, cin, _ = w.shape
    li = jnp.arange(l_len)
    k = li[:, None] - li[None, :] + PAD                    # (l_in, l_out)
    valid = ((k >= 0) & (k < K)).astype(jnp.float32)
    kc = jnp.clip(k, 0, K - 1)
    wt = jnp.transpose(w, (1, 2, 0))                       # (Cin, K, Cout)
    band = wt[:, kc, :] * valid[None, :, :, None]          # (Cin, l_in, l_out, Cout)
    if row_lmajor:
        band = jnp.transpose(band, (1, 0, 2, 3))           # (l_in, Cin, l_out, Cout)
    rows = cin * l_len
    band = band.reshape(rows, l_len // 2, 2, cout)         # l_out -> (pos, parity)
    band = jnp.transpose(band, (0, 2, 1, 3))               # (rows, parity, pos, Cout)
    half = (l_len // 2) * cout
    band = band.reshape(rows, 2, half)
    band = jnp.pad(band, ((0, 0), (0, 0), (0, half_pad - half)))
    return band.reshape(rows, 2 * half_pad)


def _bn_cols(scale, shift, npos, half_pad):
    """Tile per-channel BN scale/shift over (parity, pos, chan) padded columns."""
    c = scale.shape[0]
    sh = jnp.pad(jnp.tile(scale, npos), (0, half_pad - npos * c))
    th = jnp.pad(jnp.tile(shift, npos), (0, half_pad - npos * c))
    s = jnp.concatenate([sh, sh]).reshape(1, 2 * half_pad).astype(jnp.float32)
    t = jnp.concatenate([th, th]).reshape(1, 2 * half_pad).astype(jnp.float32)
    return s, t


def convert_params(p, dtype=COMPUTE_DTYPE):
    """Torch-layout params -> kernel-layout params (BN + conv bias folded, padded)."""
    f32 = jnp.float32
    # Eval-mode BN folded with the conv bias: (acc + b - m)*s + be
    s1 = p['g1'] / jnp.sqrt(p['v1'] + BN_EPS)
    t1 = p['be1'] + (p['b1'] - p['m1']) * s1
    s2 = p['g2'] / jnp.sqrt(p['v2'] + BN_EPS)
    t2 = p['be2'] + (p['b2'] - p['m2']) * s2

    # rows of w1 = c_in*L_IN + l_in (matches x.reshape NCL flatten); pad 200 -> 256.
    w1_big = _conv_band(p['w1'], L_IN, row_lmajor=False, half_pad=HALF1)
    w1_big = jnp.pad(w1_big, ((0, F_IN_PAD - F_IN), (0, 0)))
    # rows of w2 = pos*C1 + c_in (matches p1 column order); pad 320 -> 384.
    w2_big = _conv_band(p['w2'], L2, row_lmajor=True, half_pad=HALF2)
    w2_big = jnp.pad(w2_big, ((0, HALF1 - P1), (0, 0)))

    s1_big, t1_big = _bn_cols(s1, t1, L2, HALF1)           # (1, 768) each
    s2_big, t2_big = _bn_cols(s2, t2, L3, HALF2)           # (1, 768) each

    # fc1: PyTorch flatten of (C2, L3) is channel-major; our p2 is pos-major.
    fw1_r = jnp.transpose(p['fw1'].reshape(HID, C2, L3), (2, 1, 0)).reshape(P2, HID)
    fw1_r = jnp.pad(fw1_r, ((0, HALF2 - P2), (0, 0)))      # zero rows for p2 pad cols
    fb1_r = p['fb1'].reshape(1, HID).astype(f32)

    # fc2: transpose and lane-pad 53 -> OUT_PAD (full 128 lanes => unmasked stores).
    fw2_p = jnp.zeros((HID, OUT_PAD), f32).at[:, :NUM_CLASSES].set(p['fw2'].T)
    fb2_p = jnp.zeros((1, OUT_PAD), f32).at[:, :NUM_CLASSES].set(p['fb2'].reshape(1, -1))

    return (w1_big.astype(dtype), s1_big, t1_big,
            w2_big.astype(dtype), s2_big, t2_big,
            fw1_r.astype(dtype), fb1_r,
            fw2_p.astype(dtype), fb2_p)


def emgcnn_pallas(x_ncl, kernel_params, *, tb=128):
    """x_ncl: (B, NUM_CHANNELS, L_IN) float32 (PyTorch NCL). Returns (B, NUM_CLASSES)."""
    B = x_ncl.shape[0]
    tb = _round_up(max(8, min(tb, _round_up(B, 8))), 8)    # batch tile (multiple of 8)
    # On v7x, pick tb <= B/2 for large B so the batch grid shards across both TCs.
    B_pad = _round_up(B, tb)
    nb = B_pad // tb

    compute_dtype = kernel_params[0].dtype
    x_flat = x_ncl.reshape(B, F_IN).astype(compute_dtype)  # NCL flatten: row = c*L_IN + l
    x_flat = jnp.pad(x_flat, ((0, B_pad - B), (0, F_IN_PAD - F_IN)))

    in_specs = [pl.BlockSpec((tb, F_IN_PAD), lambda b: (b, 0))]
    for a in kernel_params:                                # params: full-block, VMEM-resident
        in_specs.append(pl.BlockSpec(a.shape, lambda b: (0, 0)))

    flops = 2 * B_pad * (F_IN_PAD * F1P + HALF1 * F2P + HALF2 * HID + HID * OUT_PAD)
    bytes_acc = (B_pad * F_IN_PAD * jnp.dtype(compute_dtype).itemsize
                 + B_pad * OUT_PAD * 4
                 + sum(int(a.size) * a.dtype.itemsize for a in kernel_params))

    out = pl.pallas_call(
        emgcnn_kernel,
        out_shape=jax.ShapeDtypeStruct((B_pad, OUT_PAD), jnp.float32),
        grid=(nb,),
        in_specs=in_specs,
        out_specs=pl.BlockSpec((tb, OUT_PAD), lambda b: (b, 0)),
        compiler_params=pltpu.CompilerParams(dimension_semantics=("parallel",)),
        cost_estimate=pl.CostEstimate(flops=flops, transcendentals=0,
                                      bytes_accessed=bytes_acc),
    )(x_flat, *kernel_params)
    return out[:B, :NUM_CLASSES]


# ----------------------------- reference & test -----------------------------

def torch_reference(x, p):
    """Pure-JAX replica of the PyTorch forward (eval mode), NCL layout."""
    def conv1d(h, w, b):
        y = jax.lax.conv_general_dilated(h, w, window_strides=(1,),
                                         padding=[(PAD, PAD)],
                                         dimension_numbers=('NCH', 'OIH', 'NCH'))
        return y + b[None, :, None]

    def bn(h, g, bt, m, v):
        return (h - m[None, :, None]) / jnp.sqrt(v[None, :, None] + BN_EPS) \
               * g[None, :, None] + bt[None, :, None]

    def maxpool2(h):
        B_, C_, L_ = h.shape
        return jnp.max(h.reshape(B_, C_, L_ // 2, 2), axis=-1)

    h = maxpool2(jax.nn.relu(bn(conv1d(x, p['w1'], p['b1']),
                                p['g1'], p['be1'], p['m1'], p['v1'])))
    h = maxpool2(jax.nn.relu(bn(conv1d(h, p['w2'], p['b2']),
                                p['g2'], p['be2'], p['m2'], p['v2'])))
    h = h.reshape(x.shape[0], -1)                          # channel-major flatten (torch)
    h = jax.nn.relu(h @ p['fw1'].T + p['fb1'])
    return h @ p['fw2'].T + p['fb2']


def init_params(key):
    ks = jax.random.split(key, 16)
    f32 = jnp.float32
    return {
        'w1': 0.1 * jax.random.normal(ks[0], (C1, NUM_CHANNELS, K), f32),
        'b1': 0.1 * jax.random.normal(ks[1], (C1,), f32),
        'g1': 1.0 + 0.1 * jax.random.normal(ks[2], (C1,), f32),
        'be1': 0.1 * jax.random.normal(ks[3], (C1,), f32),
        'm1': 0.1 * jax.random.normal(ks[4], (C1,), f32),
        'v1': jax.random.uniform(ks[5], (C1,), f32, 0.5, 1.5),
        'w2': 0.1 * jax.random.normal(ks[6], (C2, C1, K), f32),
        'b2': 0.1 * jax.random.normal(ks[7], (C2,), f32),
        'g2': 1.0 + 0.1 * jax.random.normal(ks[8], (C2,), f32),
        'be2': 0.1 * jax.random.normal(ks[9], (C2,), f32),
        'm2': 0.1 * jax.random.normal(ks[10], (C2,), f32),
        'v2': jax.random.uniform(ks[11], (C2,), f32, 0.5, 1.5),
        'fw1': 0.05 * jax.random.normal(ks[12], (HID, C2 * L3), f32),
        'fb1': 0.05 * jax.random.normal(ks[13], (HID,), f32),
        'fw2': 0.05 * jax.random.normal(ks[14], (NUM_CLASSES, HID), f32),
        'fb2': 0.05 * jax.random.normal(ks[15], (NUM_CLASSES,), f32),
    }


if __name__ == "__main__":
    key = jax.random.PRNGKey(0)
    k_param, k_x = jax.random.split(key)
    params = init_params(k_param)
    kernel_params = convert_params(params)

    # Small example batch (PyTorch NCL layout).
    B = 2
    x = jax.random.normal(k_x, (B, NUM_CHANNELS, L_IN), jnp.float32)

    y = jax.block_until_ready(emgcnn_pallas(x, kernel_params))
    y_ref = torch_reference(x, params)
    assert y.shape == (B, NUM_CLASSES)
    assert jnp.allclose(y, y_ref, atol=1e-4, rtol=1e-4), float(jnp.max(jnp.abs(y - y_ref)))

    # Multi-grid-step + batch-padding sanity check (B not a multiple of tb).
    B2 = 19
    x2 = jax.random.normal(jax.random.PRNGKey(1), (B2, NUM_CHANNELS, L_IN), jnp.float32)
    y2 = jax.block_until_ready(emgcnn_pallas(x2, kernel_params, tb=8))
    y2_ref = torch_reference(x2, params)
    assert y2.shape == (B2, NUM_CLASSES)
    assert jnp.allclose(y2, y2_ref, atol=1e-4, rtol=1e-4), float(jnp.max(jnp.abs(y2 - y2_ref)))

    print("KERNEL_OK")
</pallas_src>

<mosaic_0001>
module attributes {stable_mosaic.version = 11 : i64} {
  func.func @emgcnn_kernel(%arg0: i32, %arg1: memref<8x256xf32, #tpu.memory_space<vmem>>, %arg2: memref<256x768xf32, #tpu.memory_space<vmem>>, %arg3: memref<1x768xf32, #tpu.memory_space<vmem>>, %arg4: memref<1x768xf32, #tpu.memory_space<vmem>>, %arg5: memref<384x768xf32, #tpu.memory_space<vmem>>, %arg6: memref<1x768xf32, #tpu.memory_space<vmem>>, %arg7: memref<1x768xf32, #tpu.memory_space<vmem>>, %arg8: memref<384x128xf32, #tpu.memory_space<vmem>>, %arg9: memref<1x128xf32, #tpu.memory_space<vmem>>, %arg10: memref<128x128xf32, #tpu.memory_space<vmem>>, %arg11: memref<1x128xf32, #tpu.memory_space<vmem>>, %arg12: memref<8x128xf32, #tpu.memory_space<vmem>>) attributes {dimension_semantics = [#tpu.dimension_semantics<parallel>], iteration_bounds = array<i64: 1>, scalar_prefetch = 0 : i64, scratch_operands = 0 : i64, tpu.core_type = #tpu.core_type<tc>, window_params = [{transform_indices = @transform_0, window_bounds = array<i64: 8, 256>}, {pipeline_mode = #tpu.pipeline_mode<synchronous>, transform_indices = @transform_1, window_bounds = array<i64: 256, 768>}, {pipeline_mode = #tpu.pipeline_mode<synchronous>, transform_indices = @transform_2, window_bounds = array<i64: 1, 768>}, {pipeline_mode = #tpu.pipeline_mode<synchronous>, transform_indices = @transform_3, window_bounds = array<i64: 1, 768>}, {pipeline_mode = #tpu.pipeline_mode<synchronous>, transform_indices = @transform_4, window_bounds = array<i64: 384, 768>}, {pipeline_mode = #tpu.pipeline_mode<synchronous>, transform_indices = @transform_5, window_bounds = array<i64: 1, 768>}, {pipeline_mode = #tpu.pipeline_mode<synchronous>, transform_indices = @transform_6, window_bounds = array<i64: 1, 768>}, {pipeline_mode = #tpu.pipeline_mode<synchronous>, transform_indices = @transform_7, window_bounds = array<i64: 384, 128>}, {pipeline_mode = #tpu.pipeline_mode<synchronous>, transform_indices = @transform_8, window_bounds = array<i64: 1, 128>}, {pipeline_mode = #tpu.pipeline_mode<synchronous>, transform_indices = @transform_9, window_bounds = array<i64: 128, 128>}, {pipeline_mode = #tpu.pipeline_mode<synchronous>, transform_indices = @transform_10, window_bounds = array<i64: 1, 128>}, {transform_indices = @transform_11, window_bounds = array<i64: 8, 128>}]} {
    %c0 = arith.constant 0 : index
    %c0_0 = arith.constant 0 : index
    %0 = vector.load %arg1[%c0, %c0_0] : memref<8x256xf32, #tpu.memory_space<vmem>>, vector<8x256xf32>
    %c0_1 = arith.constant 0 : index
    %c0_2 = arith.constant 0 : index
    %1 = vector.load %arg2[%c0_1, %c0_2] : memref<256x768xf32, #tpu.memory_space<vmem>>, vector<256x768xf32>
    %cst = arith.constant dense<0.000000e+00> : vector<8x768xf32>
    %2 = tpu.matmul %0, %1, %cst {dimension_numbers = #tpu.dot_dimension_numbers<[1], [0], [0], [1], [0, 0, 1, 1], [], []>} : vector<8x256xf32>, vector<256x768xf32>, vector<8x768xf32> -> vector<8x768xf32>
    %c0_3 = arith.constant 0 : index
    %c0_4 = arith.constant 0 : index
    %3 = vector.load %arg3[%c0_3, %c0_4] : memref<1x768xf32, #tpu.memory_space<vmem>>, vector<1x768xf32>
    %4 = vector.broadcast %3 : vector<1x768xf32> to vector<8x768xf32>
    %5 = arith.mulf %2, %4 : vector<8x768xf32>
    %c0_5 = arith.constant 0 : index
    %c0_6 = arith.constant 0 : index
    %6 = vector.load %arg4[%c0_5, %c0_6] : memref<1x768xf32, #tpu.memory_space<vmem>>, vector<1x768xf32>
    %7 = vector.broadcast %6 : vector<1x768xf32> to vector<8x768xf32>
    %8 = arith.addf %5, %7 : vector<8x768xf32>
    %cst_7 = arith.constant 0.000000e+00 : f32
    %9 = vector.broadcast %cst_7 : f32 to vector<8x768xf32>
    %10 = arith.maximumf %8, %9 : vector<8x768xf32>
    %11 = vector.extract_strided_slice %10 {offsets = [0, 0], sizes = [8, 384], strides = [1, 1]} : vector<8x768xf32> to vector<8x384xf32>
    %12 = vector.extract_strided_slice %10 {offsets = [0, 384], sizes = [8, 384], strides = [1, 1]} : vector<8x768xf32> to vector<8x384xf32>
    %13 = arith.maximumf %11, %12 : vector<8x384xf32>
    %c0_8 = arith.constant 0 : index
    %c0_9 = arith.constant 0 : index
    %14 = vector.load %arg5[%c0_8, %c0_9] : memref<384x768xf32, #tpu.memory_space<vmem>>, vector<384x768xf32>
    %cst_10 = arith.constant dense<0.000000e+00> : vector<8x768xf32>
    %15 = tpu.matmul %13, %14, %cst_10 {dimension_numbers = #tpu.dot_dimension_numbers<[1], [0], [0], [1], [0, 0, 1, 1], [], []>} : vector<8x384xf32>, vector<384x768xf32>, vector<8x768xf32> -> vector<8x768xf32>
    %c0_11 = arith.constant 0 : index
    %c0_12 = arith.constant 0 : index
    %16 = vector.load %arg6[%c0_11, %c0_12] : memref<1x768xf32, #tpu.memory_space<vmem>>, vector<1x768xf32>
    %17 = vector.broadcast %16 : vector<1x768xf32> to vector<8x768xf32>
    %18 = arith.mulf %15, %17 : vector<8x768xf32>
    %c0_13 = arith.constant 0 : index
    %c0_14 = arith.constant 0 : index
    %19 = vector.load %arg7[%c0_13, %c0_14] : memref<1x768xf32, #tpu.memory_space<vmem>>, vector<1x768xf32>
    %20 = vector.broadcast %19 : vector<1x768xf32> to vector<8x768xf32>
    %21 = arith.addf %18, %20 : vector<8x768xf32>
    %cst_15 = arith.constant 0.000000e+00 : f32
    %22 = vector.broadcast %cst_15 : f32 to vector<8x768xf32>
    %23 = arith.maximumf %21, %22 : vector<8x768xf32>
    %24 = vector.extract_strided_slice %23 {offsets = [0, 0], sizes = [8, 384], strides = [1, 1]} : vector<8x768xf32> to vector<8x384xf32>
    %25 = vector.extract_strided_slice %23 {offsets = [0, 384], sizes = [8, 384], strides = [1, 1]} : vector<8x768xf32> to vector<8x384xf32>
    %26 = arith.maximumf %24, %25 : vector<8x384xf32>
    %c0_16 = arith.constant 0 : index
    %c0_17 = arith.constant 0 : index
    %27 = vector.load %arg8[%c0_16, %c0_17] : memref<384x128xf32, #tpu.memory_space<vmem>>, vector<384x128xf32>
    %cst_18 = arith.constant dense<0.000000e+00> : vector<8x128xf32>
    %28 = tpu.matmul %26, %27, %cst_18 {dimension_numbers = #tpu.dot_dimension_numbers<[1], [0], [0], [1], [0, 0, 1, 1], [], []>} : vector<8x384xf32>, vector<384x128xf32>, vector<8x128xf32> -> vector<8x128xf32>
    %c0_19 = arith.constant 0 : index
    %c0_20 = arith.constant 0 : index
    %29 = vector.load %arg9[%c0_19, %c0_20] : memref<1x128xf32, #tpu.memory_space<vmem>>, vector<1x128xf32>
    %30 = vector.broadcast %29 : vector<1x128xf32> to vector<8x128xf32>
    %31 = arith.addf %28, %30 : vector<8x128xf32>
    %cst_21 = arith.constant 0.000000e+00 : f32
    %32 = vector.broadcast %cst_21 : f32 to vector<8x128xf32>
    %33 = arith.maximumf %31, %32 : vector<8x128xf32>
    %c0_22 = arith.constant 0 : index
    %c0_23 = arith.constant 0 : index
    %34 = vector.load %arg10[%c0_22, %c0_23] : memref<128x128xf32, #tpu.memory_space<vmem>>, vector<128x128xf32>
    %cst_24 = arith.constant dense<0.000000e+00> : vector<8x128xf32>
    %35 = tpu.matmul %33, %34, %cst_24 {dimension_numbers = #tpu.dot_dimension_numbers<[1], [0], [0], [1], [0, 0, 1, 1], [], []>} : vector<8x128xf32>, vector<128x128xf32>, vector<8x128xf32> -> vector<8x128xf32>
    %c0_25 = arith.constant 0 : index
    %c0_26 = arith.constant 0 : index
    %36 = vector.load %arg11[%c0_25, %c0_26] : memref<1x128xf32, #tpu.memory_space<vmem>>, vector<1x128xf32>
    %37 = vector.broadcast %36 : vector<1x128xf32> to vector<8x128xf32>
    %38 = arith.addf %35, %37 : vector<8x128xf32>
    %c0_27 = arith.constant 0 : index
    %c0_28 = arith.constant 0 : index
    %39 = vector.load %arg12[%c0_27, %c0_28] : memref<8x128xf32, #tpu.memory_space<vmem>>, vector<8x128xf32>
    tpu.vector_store %arg12[%c0_27, %c0_28], %38 {strides = array<i32>} : memref<8x128xf32, #tpu.memory_space<vmem>>, vector<8x128xf32>,
    return
  }
  func.func @transform_0(%arg0: i32) -> (i32, i32) {
    %c0_i32 = arith.constant 0 : i32
    %c0_i32_0 = arith.constant 0 : i32
    return %arg0, %c0_i32 : i32, i32
  }
  func.func @transform_1(%arg0: i32) -> (i32, i32) {
    %c0_i32 = arith.constant 0 : i32
    %c0_i32_0 = arith.constant 0 : i32
    %c0_i32_1 = arith.constant 0 : i32
    return %c0_i32, %c0_i32_0 : i32, i32
  }
  func.func @transform_2(%arg0: i32) -> (i32, i32) {
    %c0_i32 = arith.constant 0 : i32
    %c0_i32_0 = arith.constant 0 : i32
    %c0_i32_1 = arith.constant 0 : i32
    return %c0_i32, %c0_i32_0 : i32, i32
  }
  func.func @transform_3(%arg0: i32) -> (i32, i32) {
    %c0_i32 = arith.constant 0 : i32
    %c0_i32_0 = arith.constant 0 : i32
    %c0_i32_1 = arith.constant 0 : i32
    return %c0_i32, %c0_i32_0 : i32, i32
  }
  func.func @transform_4(%arg0: i32) -> (i32, i32) {
    %c0_i32 = arith.constant 0 : i32
    %c0_i32_0 = arith.constant 0 : i32
    %c0_i32_1 = arith.constant 0 : i32
    return %c0_i32, %c0_i32_0 : i32, i32
  }
  func.func @transform_5(%arg0: i32) -> (i32, i32) {
    %c0_i32 = arith.constant 0 : i32
    %c0_i32_0 = arith.constant 0 : i32
    %c0_i32_1 = arith.constant 0 : i32
    return %c0_i32, %c0_i32_0 : i32, i32
  }
  func.func @transform_6(%arg0: i32) -> (i32, i32) {
    %c0_i32 = arith.constant 0 : i32
    %c0_i32_0 = arith.constant 0 : i32
    %c0_i32_1 = arith.constant 0 : i32
    return %c0_i32, %c0_i32_0 : i32, i32
  }
  func.func @transform_7(%arg0: i32) -> (i32, i32) {
    %c0_i32 = arith.constant 0 : i32
    %c0_i32_0 = arith.constant 0 : i32
    %c0_i32_1 = arith.constant 0 : i32
    return %c0_i32, %c0_i32_0 : i32, i32
  }
  func.func @transform_8(%arg0: i32) -> (i32, i32) {
    %c0_i32 = arith.constant 0 : i32
    %c0_i32_0 = arith.constant 0 : i32
    %c0_i32_1 = arith.constant 0 : i32
    return %c0_i32, %c0_i32_0 : i32, i32
  }
  func.func @transform_9(%arg0: i32) -> (i32, i32) {
    %c0_i32 = arith.constant 0 : i32
    %c0_i32_0 = arith.constant 0 : i32
    %c0_i32_1 = arith.constant 0 : i32
    return %c0_i32, %c0_i32_0 : i32, i32
  }
  func.func @transform_10(%arg0: i32) -> (i32, i32) {
    %c0_i32 = arith.constant 0 : i32
    %c0_i32_0 = arith.constant 0 : i32
    %c0_i32_1 = arith.constant 0 : i32
    return %c0_i32, %c0_i32_0 : i32, i32
  }
  func.func @transform_11(%arg0: i32) -> (i32, i32) {
    %c0_i32 = arith.constant 0 : i32
    %c0_i32_0 = arith.constant 0 : i32
    return %arg0, %c0_i32 : i32, i32
  }
}

</mosaic_0001>

<llo_original>
// kernel: tpu_custom_call.1
$region0: #{tpu_custom_call.1}
  #allocation0 [shape = 'u32[]', space=smem, size = 0x4, offset = 0x4, fixed_abs, tag = 'smem constant byte address 0x4 - core index']
  #allocation1 [shape = 'u32[144,128]{1,0:T(1,128)}', space=vmem, size = 0x12000, scoped, tag = 'internal scratch']
  %s0 = inlined_call_operand.hbm [shape: f32[8,256], index: 0, kind: input, shape index: {}]
  %s1 = inlined_call_operand.hbm [shape: f32[256,768], index: 1, kind: input, shape index: {}]
  %s2 = inlined_call_operand.hbm [shape: f32[1,768], index: 2, kind: input, shape index: {}]
  %s3 = inlined_call_operand.hbm [shape: f32[1,768], index: 3, kind: input, shape index: {}]
  %s4 = inlined_call_operand.hbm [shape: f32[384,768], index: 4, kind: input, shape index: {}]
  %s5 = inlined_call_operand.hbm [shape: f32[1,768], index: 5, kind: input, shape index: {}]
  %s6 = inlined_call_operand.hbm [shape: f32[1,768], index: 6, kind: input, shape index: {}]
  %s7 = inlined_call_operand.hbm [shape: f32[384,128], index: 7, kind: input, shape index: {}]
  %s8 = inlined_call_operand.hbm [shape: f32[1,128], index: 8, kind: input, shape index: {}]
  %s9 = inlined_call_operand.hbm [shape: f32[128,128], index: 9, kind: input, shape index: {}]
  %s10 = inlined_call_operand.hbm [shape: f32[1,128], index: 10, kind: input, shape index: {}]
  %s11 = inlined_call_operand.hbm [shape: f32[8,128], index: 11, kind: output, shape index: {}]
  %s12 = sld [smem:[#allocation0]]
  $region98: #{tpu_custom_call.1} parent=0
    _
  %s14 = ssub.s32 1, %s12
  %s15 = scalar_select 0, %s14, %s12
  $region1: #{tpu_custom_call.1} parent=0
    #allocation2 [shape = 'u8[8192]{0}', space=vmem, size = 0x2000, scoped, tag = 'input window, operand 0, single buffered']
    #allocation3 [shape = 's32[1]{0}', space=sflag, size = 0x4, scoped, tag = 'scoped memory for tpu_custom_call.1']
    #allocation4 [shape = 's32[1]{0}', space=sflag, size = 0x4, scoped, tag = 'scoped memory for tpu_custom_call.1']
    #allocation5 [shape = 'u8[786432]{0}', space=vmem, size = 0xc0000, scoped, tag = 'input window, operand 1, single buffered']
    #allocation6 [shape = 's32[1]{0}', space=sflag, size = 0x4, scoped, tag = 'scoped memory for tpu_custom_call.1']
    #allocation7 [shape = 'u8[3072]{0}', space=vmem, size = 0xc00, scoped, tag = 'input window, operand 2, single buffered']
    #allocation8 [shape = 'u8[3072]{0}', space=vmem, size = 0xc00, scoped, tag = 'input window, operand 3, single buffered']
    #allocation9 [shape = 's32[1]{0}', space=sflag, size = 0x4, scoped, tag = 'scoped memory for tpu_custom_call.1']
    #allocation10 [shape = 'u8[1179648]{0}', space=vmem, size = 0x120000, scoped, tag = 'input window, operand 4, single buffered']
    #allocation11 [shape = 'u8[3072]{0}', space=vmem, size = 0xc00, scoped, tag = 'input window, operand 5, single buffered']
    #allocation12 [shape = 's32[1]{0}', space=sflag, size = 0x4, scoped, tag = 'scoped memory for tpu_custom_call.1']
    #allocation13 [shape = 'u8[3072]{0}', space=vmem, size = 0xc00, scoped, tag = 'input window, operand 6, single buffered']
    #allocation14 [shape = 'u8[196608]{0}', space=vmem, size = 0x30000, scoped, tag = 'input window, operand 7, single buffered']
    #allocation15 [shape = 's32[1]{0}', space=sflag, size = 0x4, scoped, tag = 'scoped memory for tpu_custom_call.1']
    #allocation16 [shape = 'u8[512]{0}', space=vmem, size = 0x400, scoped, tag = 'input window, operand 8, single buffered']
    #allocation17 [shape = 'u8[65536]{0}', space=vmem, size = 0x10000, scoped, tag = 'input window, operand 9, single buffered']
    #allocation18 [shape = 's32[1]{0}', space=sflag, size = 0x4, scoped, tag = 'scoped memory for tpu_custom_call.1']
    #allocation19 [shape = 'u8[512]{0}', space=vmem, size = 0x400, scoped, tag = 'input window, operand 10, single buffered']
    #allocation20 [shape = 'u8[4096]{0}', space=vmem, size = 0x1000, scoped, tag = 'output window, operand 0, single buffered']
    %16 = vsyncpa [#allocation3], 0
    %17 = vsyncpa [#allocation6], 0
    %18 = vsyncpa [#allocation9], 0
    %19 = vsyncpa [#allocation12], 0
    %20 = vsyncpa [#allocation15], 0
    %21 = vsyncpa [#allocation18], 0
    %22 = vsyncpa [#allocation4], 0
    // Predicated region
    $region2: #{tpu_custom_call.1} parent=1 // pred_check
      _
    $region3: #{tpu_custom_call.1} parent=1 // pred_check_branch
      %24 = sbr.rel (0) target = $region5
    $region4: #{tpu_custom_call.1} parent=1 // pred_region
      %s26 = ssub.s32 256, 256
      %27 = vsyncadd [#allocation3], %s26
      %s29 = sshll.u32 [#allocation2], 4
      %s30 = int_to_ptr.vmem [resolvable:$true] %s29
      %32 = dma.hbm_to_vmem [thread:$0]  %s0, 256, %s30, [#allocation3]
    $region5: #{tpu_custom_call.1} parent=1 // pred_fallthru
      _
    // Predicated region
    $region6: #{tpu_custom_call.1} parent=1 // pred_check
      _
    $region7: #{tpu_custom_call.1} parent=1 // pred_check_branch
      %34 = sbr.rel (0) target = $region9
    $region8: #{tpu_custom_call.1} parent=1 // pred_region
      %s36 = ssub.s32 24576, 24576
      %37 = vsyncadd [#allocation6], %s36
      %s38 = sshll.u32 [#allocation5], 4
      %s39 = int_to_ptr.vmem [resolvable:$true] %s38
      %44 = dma.hbm_to_vmem [thread:$0]  %s1, 24576, %s39, [#allocation6], 768, 768, 48
    $region9: #{tpu_custom_call.1} parent=1 // pred_fallthru
      _
    // Predicated region
    $region10: #{tpu_custom_call.1} parent=1 // pred_check
      _
    $region11: #{tpu_custom_call.1} parent=1 // pred_check_branch
      %46 = sbr.rel (0) target = $region13
    $region12: #{tpu_custom_call.1} parent=1 // pred_region
      %s48 = ssub.s32 96, 96
      %49 = vsyncadd [#allocation6], %s48
      %s51 = sshll.u32 [#allocation7], 4
      %s52 = int_to_ptr.vmem [resolvable:$true] %s51
      %54 = dma.hbm_to_vmem [thread:$0]  %s2, 96, %s52, [#allocation6]
    $region13: #{tpu_custom_call.1} parent=1 // pred_fallthru
      _
    // Predicated region
    $region14: #{tpu_custom_call.1} parent=1 // pred_check
      _
    $region15: #{tpu_custom_call.1} parent=1 // pred_check_branch
      %56 = sbr.rel (0) target = $region17
    $region16: #{tpu_custom_call.1} parent=1 // pred_region
      %s58 = ssub.s32 96, 96
      %59 = vsyncadd [#allocation9], %s58
      %s61 = sshll.u32 [#allocation8], 4
      %s62 = int_to_ptr.vmem [resolvable:$true] %s61
      %64 = dma.hbm_to_vmem [thread:$0]  %s3, 96, %s62, [#allocation9]
    $region17: #{tpu_custom_call.1} parent=1 // pred_fallthru
      _
    // Predicated region
    $region18: #{tpu_custom_call.1} parent=1 // pred_check
      _
    $region19: #{tpu_custom_call.1} parent=1 // pred_check_branch
      %66 = sbr.rel (0) target = $region21
    $region20: #{tpu_custom_call.1} parent=1 // pred_region
      %s68 = ssub.s32 36864, 36864
      %69 = vsyncadd [#allocation9], %s68
      %s70 = sshll.u32 [#allocation10], 4
      %s71 = int_to_ptr.vmem [resolvable:$true] %s70
      %76 = dma.hbm_to_vmem [thread:$0]  %s4, 36864, %s71, [#allocation9], 768, 768, 48
    $region21: #{tpu_custom_call.1} parent=1 // pred_fallthru
      _
    // Predicated region
    $region22: #{tpu_custom_call.1} parent=1 // pred_check
      _
    $region23: #{tpu_custom_call.1} parent=1 // pred_check_branch
      %78 = sbr.rel (0) target = $region25
    $region24: #{tpu_custom_call.1} parent=1 // pred_region
      %s80 = ssub.s32 96, 96
      %81 = vsyncadd [#allocation12], %s80
      %s83 = sshll.u32 [#allocation11], 4
      %s84 = int_to_ptr.vmem [resolvable:$true] %s83
      %86 = dma.hbm_to_vmem [thread:$0]  %s5, 96, %s84, [#allocation12]
    $region25: #{tpu_custom_call.1} parent=1 // pred_fallthru
      _
    // Predicated region
    $region26: #{tpu_custom_call.1} parent=1 // pred_check
      _
    $region27: #{tpu_custom_call.1} parent=1 // pred_check_branch
      %88 = sbr.rel (0) target = $region29
    $region28: #{tpu_custom_call.1} parent=1 // pred_region
      %s90 = ssub.s32 96, 96
      %91 = vsyncadd [#allocation12], %s90
      %s93 = sshll.u32 [#allocation13], 4
      %s94 = int_to_ptr.vmem [resolvable:$true] %s93
      %96 = dma.hbm_to_vmem [thread:$0]  %s6, 96, %s94, [#allocation12]
    $region29: #{tpu_custom_call.1} parent=1 // pred_fallthru
      _
    // Predicated region
    $region30: #{tpu_custom_call.1} parent=1 // pred_check
      _
    $region31: #{tpu_custom_call.1} parent=1 // pred_check_branch
      %98 = sbr.rel (0) target = $region33
    $region32: #{tpu_custom_call.1} parent=1 // pred_region
      %s100 = ssub.s32 6144, 6144
      %101 = vsyncadd [#allocation15], %s100
      %s102 = sshll.u32 [#allocation14], 4
      %s103 = int_to_ptr.vmem [resolvable:$true] %s102
      %108 = dma.hbm_to_vmem [thread:$0]  %s7, 6144, %s103, [#allocation15], 128, 128, 8
    $region33: #{tpu_custom_call.1} parent=1 // pred_fallthru
      _
    // Predicated region
    $region34: #{tpu_custom_call.1} parent=1 // pred_check
      _
    $region35: #{tpu_custom_call.1} parent=1 // pred_check_branch
      %110 = sbr.rel (0) target = $region37
    $region36: #{tpu_custom_call.1} parent=1 // pred_region
      %s112 = ssub.s32 16, 16
      %113 = vsyncadd [#allocation15], %s112
      %s115 = sshll.u32 [#allocation16], 4
      %s116 = int_to_ptr.vmem [resolvable:$true] %s115
      %118 = dma.hbm_to_vmem [thread:$0]  %s8, 16, %s116, [#allocation15]
    $region37: #{tpu_custom_call.1} parent=1 // pred_fallthru
      _
    // Predicated region
    $region38: #{tpu_custom_call.1} parent=1 // pred_check
      _
    $region39: #{tpu_custom_call.1} parent=1 // pred_check_branch
      %120 = sbr.rel (0) target = $region41
    $region40: #{tpu_custom_call.1} parent=1 // pred_region
      %s122 = ssub.s32 2048, 2048
      %123 = vsyncadd [#allocation18], %s122
      %s124 = sshll.u32 [#allocation17], 4
      %s125 = int_to_ptr.vmem [resolvable:$true] %s124
      %130 = dma.hbm_to_vmem [thread:$0]  %s9, 2048, %s125, [#allocation18], 128, 128, 8
    $region41: #{tpu_custom_call.1} parent=1 // pred_fallthru
      _
    // Predicated region
    $region42: #{tpu_custom_call.1} parent=1 // pred_check
      _
    $region43: #{tpu_custom_call.1} parent=1 // pred_check_branch
      %132 = sbr.rel (0) target = $region45
    $region44: #{tpu_custom_call.1} parent=1 // pred_region
      %s134 = ssub.s32 16, 16
      %135 = vsyncadd [#allocation18], %s134
      %s137 = sshll.u32 [#allocation19], 4
      %s138 = int_to_ptr.vmem [resolvable:$true] %s137
      %140 = dma.hbm_to_vmem [thread:$0]  %s10, 16, %s138, [#allocation18]
    $region45: #{tpu_custom_call.1} parent=1 // pred_fallthru
      _
    // Predicated region
    $region46: #{tpu_custom_call.1} parent=1 // pred_check
      _
    $region47: #{tpu_custom_call.1} parent=1 // pred_check_branch
      %142 = sbr.rel (0) target = $region49
    $region48: #{tpu_custom_call.1} parent=1 // pred_region
      %143 = dma.done [#allocation3], 256
    $region49: #{tpu_custom_call.1} parent=1 // pred_fallthru
      _
    // Predicated region
    $region50: #{tpu_custom_call.1} parent=1 // pred_check
      _
    $region51: #{tpu_custom_call.1} parent=1 // pred_check_branch
      %145 = sbr.rel (0) target = $region53
    $region52: #{tpu_custom_call.1} parent=1 // pred_region
      %146 = dma.done [#allocation6], 24576
    $region53: #{tpu_custom_call.1} parent=1 // pred_fallthru
      _
    // Predicated region
    $region54: #{tpu_custom_call.1} parent=1 // pred_check
      _
    $region55: #{tpu_custom_call.1} parent=1 // pred_check_branch
      %148 = sbr.rel (0) target = $region57
    $region56: #{tpu_custom_call.1} parent=1 // pred_region
      %149 = dma.done [#allocation6], 96
    $region57: #{tpu_custom_call.1} parent=1 // pred_fallthru
      _
    // Predicated region
    $region58: #{tpu_custom_call.1} parent=1 // pred_check
      _
    $region59: #{tpu_custom_call.1} parent=1 // pred_check_branch
      %151 = sbr.rel (0) target = $region61
    $region60: #{tpu_custom_call.1} parent=1 // pred_region
      %152 = dma.done [#allocation9], 96
    $region61: #{tpu_custom_call.1} parent=1 // pred_fallthru
      _
    // Predicated region
    $region62: #{tpu_custom_call.1} parent=1 // pred_check
      _
    $region63: #{tpu_custom_call.1} parent=1 // pred_check_branch
      %154 = sbr.rel (0) target = $region65
    $region64: #{tpu_custom_call.1} parent=1 // pred_region
      %155 = dma.done [#allocation9], 36864
    $region65: #{tpu_custom_call.1} parent=1 // pred_fallthru
      _
    // Predicated region
    $region66: #{tpu_custom_call.1} parent=1 // pred_check
      _
    $region67: #{tpu_custom_call.1} parent=1 // pred_check_branch
      %157 = sbr.rel (0) target = $region69
    $region68: #{tpu_custom_call.1} parent=1 // pred_region
      %158 = dma.done [#allocation12], 96
    $region69: #{tpu_custom_call.1} parent=1 // pred_fallthru
      _
    // Predicated region
    $region70: #{tpu_custom_call.1} parent=1 // pred_check
      _
    $region71: #{tpu_custom_call.1} parent=1 // pred_check_branch
      %160 = sbr.rel (0) target = $region73
    $region72: #{tpu_custom_call.1} parent=1 // pred_region
      %161 = dma.done [#allocation12], 96
    $region73: #{tpu_custom_call.1} parent=1 // pred_fallthru
      _
    // Predicated region
    $region74: #{tpu_custom_call.1} parent=1 // pred_check
      _
    $region75: #{tpu_custom_call.1} parent=1 // pred_check_branch
      %163 = sbr.rel (0) target = $region77
    $region76: #{tpu_custom_call.1} parent=1 // pred_region
      %164 = dma.done [#allocation15], 6144
    $region77: #{tpu_custom_call.1} parent=1 // pred_fallthru
      _
    // Predicated region
    $region78: #{tpu_custom_call.1} parent=1 // pred_check
      _
    $region79: #{tpu_custom_call.1} parent=1 // pred_check_branch
      %166 = sbr.rel (0) target = $region81
    $region80: #{tpu_custom_call.1} parent=1 // pred_region
      %167 = dma.done [#allocation15], 16
    $region81: #{tpu_custom_call.1} parent=1 // pred_fallthru
      _
    // Predicated region
    $region82: #{tpu_custom_call.1} parent=1 // pred_check
      _
    $region83: #{tpu_custom_call.1} parent=1 // pred_check_branch
      %169 = sbr.rel (0) target = $region85
    $region84: #{tpu_custom_call.1} parent=1 // pred_region
      %170 = dma.done [#allocation18], 2048
    $region85: #{tpu_custom_call.1} parent=1 // pred_fallthru
      _
    // Predicated region
    $region86: #{tpu_custom_call.1} parent=1 // pred_check
      _
    $region87: #{tpu_custom_call.1} parent=1 // pred_check_branch
      %172 = sbr.rel (0) target = $region89
    $region88: #{tpu_custom_call.1} parent=1 // pred_region
      %173 = dma.done [#allocation18], 16
    $region89: #{tpu_custom_call.1} parent=1 // pred_fallthru
      _
    %v174 = vld [vmem:[#allocation2] sm:$0xff]
    %v175 = vld [vmem:[#allocation2 + $0x8] sm:$0xff]
    %v176 = vld [vmem:[#allocation5] sm:$0xff]
    %v177 = vld [vmem:[#allocation5 + $0x8] sm:$0xff]
    %v178 = vld [vmem:[#allocation5 + $0x10] sm:$0xff]
    %v179 = vld [vmem:[#allocation5 + $0x18] sm:$0xff]
    %v180 = vld [vmem:[#allocation5 + $0x20] sm:$0xff]
    %v181 = vld [vmem:[#allocation5 + $0x28] sm:$0xff]
    %v182 = vld [vmem:[#allocation5 + $0x30] sm:$0xff]
    %v183 = vld [vmem:[#allocation5 + $0x38] sm:$0xff]
    %v184 = vld [vmem:[#allocation5 + $0x40] sm:$0xff]
    %v185 = vld [vmem:[#allocation5 + $0x48] sm:$0xff]
    %v186 = vld [vmem:[#allocation5 + $0x50] sm:$0xff]
    %v187 = vld [vmem:[#allocation5 + $0x58] sm:$0xff]
    %v188 = vld [vmem:[#allocation5 + $0x60] sm:$0xff]
    %v189 = vld [vmem:[#allocation5 + $0x68] sm:$0xff]
    %v190 = vld [vmem:[#allocation5 + $0x70] sm:$0xff]
    %v191 = vld [vmem:[#allocation5 + $0x78] sm:$0xff]
    %v192 = vld [vmem:[#allocation5 + $0x80] sm:$0xff]
    %v193 = vld [vmem:[#allocation5 + $0x88] sm:$0xff]
    %v194 = vld [vmem:[#allocation5 + $0x90] sm:$0xff]
    %v195 = vld [vmem:[#allocation5 + $0x98] sm:$0xff]
    %v196 = vld [vmem:[#allocation5 + $0xa0] sm:$0xff]
    %v197 = vld [vmem:[#allocation5 + $0xa8] sm:$0xff]
    %v198 = vld [vmem:[#allocation5 + $0xb0] sm:$0xff]
    %v199 = vld [vmem:[#allocation5 + $0xb8] sm:$0xff]
    %v200 = vld [vmem:[#allocation5 + $0xc0] sm:$0xff]
    %v201 = vld [vmem:[#allocation5 + $0xc8] sm:$0xff]
    %v202 = vld [vmem:[#allocation5 + $0xd0] sm:$0xff]
    %v203 = vld [vmem:[#allocation5 + $0xd8] sm:$0xff]
    %v204 = vld [vmem:[#allocation5 + $0xe0] sm:$0xff]
    %v205 = vld [vmem:[#allocation5 + $0xe8] sm:$0xff]
    %v206 = vld [vmem:[#allocation5 + $0xf0] sm:$0xff]
    %v207 = vld [vmem:[#allocation5 + $0xf8] sm:$0xff]
    %v208 = vld [vmem:[#allocation5 + $0x100] sm:$0xff]
    %v209 = vld [vmem:[#allocation5 + $0x108] sm:$0xff]
    %v210 = vld [vmem:[#allocation5 + $0x110] sm:$0xff]
    %v211 = vld [vmem:[#allocation5 + $0x118] sm:$0xff]
    %v212 = vld [vmem:[#allocation5 + $0x120] sm:$0xff]
    %v213 = vld [vmem:[#allocation5 + $0x128] sm:$0xff]
    %v214 = vld [vmem:[#allocation5 + $0x130] sm:$0xff]
    %v215 = vld [vmem:[#allocation5 + $0x138] sm:$0xff]
    %v216 = vld [vmem:[#allocation5 + $0x140] sm:$0xff]
    %v217 = vld [vmem:[#allocation5 + $0x148] sm:$0xff]
    %v218 = vld [vmem:[#allocation5 + $0x150] sm:$0xff]
    %v219 = vld [vmem:[#allocation5 + $0x158] sm:$0xff]
    %v220 = vld [vmem:[#allocation5 + $0x160] sm:$0xff]
    %v221 = vld [vmem:[#allocation5 + $0x168] sm:$0xff]
    %v222 = vld [vmem:[#allocation5 + $0x170] sm:$0xff]
    %v223 = vld [vmem:[#allocation5 + $0x178] sm:$0xff]
    %v224 = vld [vmem:[#allocation5 + $0x180] sm:$0xff]
    %v225 = vld [vmem:[#allocation5 + $0x188] sm:$0xff]
    %v226 = vld [vmem:[#allocation5 + $0x190] sm:$0xff]
    %v227 = vld [vmem:[#allocation5 + $0x198] sm:$0xff]
    %v228 = vld [vmem:[#allocation5 + $0x1a0] sm:$0xff]
    %v229 = vld [vmem:[#allocation5 + $0x1a8] sm:$0xff]
    %v230 = vld [vmem:[#allocation5 + $0x1b0] sm:$0xff]
    %v231 = vld [vmem:[#allocation5 + $0x1b8] sm:$0xff]
    %v232 = vld [vmem:[#allocation5 + $0x1c0] sm:$0xff]
    %v233 = vld [vmem:[#allocation5 + $0x1c8] sm:$0xff]
    %v234 = vld [vmem:[#allocation5 + $0x1d0] sm:$0xff]
    %v235 = vld [vmem:[#allocation5 + $0x1d8] sm:$0xff]
    %v236 = vld [vmem:[#allocation5 + $0x1e0] sm:$0xff]
    %v237 = vld [vmem:[#allocation5 + $0x1e8] sm:$0xff]
    %v238 = vld [vmem:[#allocation5 + $0x1f0] sm:$0xff]
    %v239 = vld [vmem:[#allocation5 + $0x1f8] sm:$0xff]
    %v240 = vld [vmem:[#allocation5 + $0x200] sm:$0xff]
    %v241 = vld [vmem:[#allocation5 + $0x208] sm:$0xff]
    %v242 = vld [vmem:[#allocation5 + $0x210] sm:$0xff]
    %v243 = vld [vmem:[#allocation5 + $0x218] sm:$0xff]
    %v244 = vld [vmem:[#allocation5 + $0x220] sm:$0xff]
    %v245 = vld [vmem:[#allocation5 + $0x228] sm:$0xff]
    %v246 = vld [vmem:[#allocation5 + $0x230] sm:$0xff]
    %v247 = vld [vmem:[#allocation5 + $0x238] sm:$0xff]
    %v248 = vld [vmem:[#allocation5 + $0x240] sm:$0xff]
    %v249 = vld [vmem:[#allocation5 + $0x248] sm:$0xff]
    %v250 = vld [vmem:[#allocation5 + $0x250] sm:$0xff]
    %v251 = vld [vmem:[#allocation5 + $0x258] sm:$0xff]
    %v252 = vld [vmem:[#allocation5 + $0x260] sm:$0xff]
    %v253 = vld [vmem:[#allocation5 + $0x268] sm:$0xff]
    %v254 = vld [vmem:[#allocation5 + $0x270] sm:$0xff]
    %v255 = vld [vmem:[#allocation5 + $0x278] sm:$0xff]
    %v256 = vld [vmem:[#allocation5 + $0x280] sm:$0xff]
    %v257 = vld [vmem:[#allocation5 + $0x288] sm:$0xff]
    %v258 = vld [vmem:[#allocation5 + $0x290] sm:$0xff]
    %v259 = vld [vmem:[#allocation5 + $0x298] sm:$0xff]
    %v260 = vld [vmem:[#allocation5 + $0x2a0] sm:$0xff]
    %v261 = vld [vmem:[#allocation5 + $0x2a8] sm:$0xff]
    %v262 = vld [vmem:[#allocation5 + $0x2b0] sm:$0xff]
    %v263 = vld [vmem:[#allocation5 + $0x2b8] sm:$0xff]
    %v264 = vld [vmem:[#allocation5 + $0x2c0] sm:$0xff]
    %v265 = vld [vmem:[#allocation5 + $0x2c8] sm:$0xff]
    %v266 = vld [vmem:[#allocation5 + $0x2d0] sm:$0xff]
    %v267 = vld [vmem:[#allocation5 + $0x2d8] sm:$0xff]
    %v268 = vld [vmem:[#allocation5 + $0x2e0] sm:$0xff]
    %v269 = vld [vmem:[#allocation5 + $0x2e8] sm:$0xff]
    %v270 = vld [vmem:[#allocation5 + $0x2f0] sm:$0xff]
    %v271 = vld [vmem:[#allocation5 + $0x2f8] sm:$0xff]
    %v272 = vld [vmem:[#allocation5 + $0x300] sm:$0xff]
    %v273 = vld [vmem:[#allocation5 + $0x308] sm:$0xff]
    %v274 = vld [vmem:[#allocation5 + $0x310] sm:$0xff]
    %v275 = vld [vmem:[#allocation5 + $0x318] sm:$0xff]
    %v276 = vld [vmem:[#allocation5 + $0x320] sm:$0xff]
    %v277 = vld [vmem:[#allocation5 + $0x328] sm:$0xff]
    %v278 = vld [vmem:[#allocation5 + $0x330] sm:$0xff]
    %v279 = vld [vmem:[#allocation5 + $0x338] sm:$0xff]
    %v280 = vld [vmem:[#allocation5 + $0x340] sm:$0xff]
    %v281 = vld [vmem:[#allocation5 + $0x348] sm:$0xff]
    %v282 = vld [vmem:[#allocation5 + $0x350] sm:$0xff]
    %v283 = vld [vmem:[#allocation5 + $0x358] sm:$0xff]
    %v284 = vld [vmem:[#allocation5 + $0x360] sm:$0xff]
    %v285 = vld [vmem:[#allocation5 + $0x368] sm:$0xff]
    %v286 = vld [vmem:[#allocation5 + $0x370] sm:$0xff]
    %v287 = vld [vmem:[#allocation5 + $0x378] sm:$0xff]
    %v288 = vld [vmem:[#allocation5 + $0x380] sm:$0xff]
    %v289 = vld [vmem:[#allocation5 + $0x388] sm:$0xff]
    %v290 = vld [vmem:[#allocation5 + $0x390] sm:$0xff]
    %v291 = vld [vmem:[#allocation5 + $0x398] sm:$0xff]
    %v292 = vld [vmem:[#allocation5 + $0x3a0] sm:$0xff]
    %v293 = vld [vmem:[#allocation5 + $0x3a8] sm:$0xff]
    %v294 = vld [vmem:[#allocation5 + $0x3b0] sm:$0xff]
    %v295 = vld [vmem:[#allocation5 + $0x3b8] sm:$0xff]
    %v296 = vld [vmem:[#allocation5 + $0x3c0] sm:$0xff]
    %v297 = vld [vmem:[#allocation5 + $0x3c8] sm:$0xff]
    %v298 = vld [vmem:[#allocation5 + $0x3d0] sm:$0xff]
    %v299 = vld [vmem:[#allocation5 + $0x3d8] sm:$0xff]
    %v300 = vld [vmem:[#allocation5 + $0x3e0] sm:$0xff]
    %v301 = vld [vmem:[#allocation5 + $0x3e8] sm:$0xff]
    %v302 = vld [vmem:[#allocation5 + $0x3f0] sm:$0xff]
    %v303 = vld [vmem:[#allocation5 + $0x3f8] sm:$0xff]
    %v304 = vld [vmem:[#allocation5 + $0x400] sm:$0xff]
    %v305 = vld [vmem:[#allocation5 + $0x408] sm:$0xff]
    %v306 = vld [vmem:[#allocation5 + $0x410] sm:$0xff]
    %v307 = vld [vmem:[#allocation5 + $0x418] sm:$0xff]
    %v308 = vld [vmem:[#allocation5 + $0x420] sm:$0xff]
    %v309 = vld [vmem:[#allocation5 + $0x428] sm:$0xff]
    %v310 = vld [vmem:[#allocation5 + $0x430] sm:$0xff]
    %v311 = vld [vmem:[#allocation5 + $0x438] sm:$0xff]
    %v312 = vld [vmem:[#allocation5 + $0x440] sm:$0xff]
    %v313 = vld [vmem:[#allocation5 + $0x448] sm:$0xff]
    %v314 = vld [vmem:[#allocation5 + $0x450] sm:$0xff]
    %v315 = vld [vmem:[#allocation5 + $0x458] sm:$0xff]
    %v316 = vld [vmem:[#allocation5 + $0x460] sm:$0xff]
    %v317 = vld [vmem:[#allocation5 + $0x468] sm:$0xff]
    %v318 = vld [vmem:[#allocation5 + $0x470] sm:$0xff]
    %v319 = vld [vmem:[#allocation5 + $0x478] sm:$0xff]
    %v320 = vld [vmem:[#allocation5 + $0x480] sm:$0xff]
    %v321 = vld [vmem:[#allocation5 + $0x488] sm:$0xff]
    %v322 = vld [vmem:[#allocation5 + $0x490] sm:$0xff]
    %v323 = vld [vmem:[#allocation5 + $0x498] sm:$0xff]
    %v324 = vld [vmem:[#allocation5 + $0x4a0] sm:$0xff]
    %v325 = vld [vmem:[#allocation5 + $0x4a8] sm:$0xff]
    %v326 = vld [vmem:[#allocation5 + $0x4b0] sm:$0xff]
    %v327 = vld [vmem:[#allocation5 + $0x4b8] sm:$0xff]
    %v328 = vld [vmem:[#allocation5 + $0x4c0] sm:$0xff]
    %v329 = vld [vmem:[#allocation5 + $0x4c8] sm:$0xff]
    %v330 = vld [vmem:[#allocation5 + $0x4d0] sm:$0xff]
    %v331 = vld [vmem:[#allocation5 + $0x4d8] sm:$0xff]
    %v332 = vld [vmem:[#allocation5 + $0x4e0] sm:$0xff]
    %v333 = vld [vmem:[#allocation5 + $0x4e8] sm:$0xff]
    %v334 = vld [vmem:[#allocation5 + $0x4f0] sm:$0xff]
    %v335 = vld [vmem:[#allocation5 + $0x4f8] sm:$0xff]
    %v336 = vld [vmem:[#allocation5 + $0x500] sm:$0xff]
    %v337 = vld [vmem:[#allocation5 + $0x508] sm:$0xff]
    %v338 = vld [vmem:[#allocation5 + $0x510] sm:$0xff]
    %v339 = vld [vmem:[#allocation5 + $0x518] sm:$0xff]
    %v340 = vld [vmem:[#allocation5 + $0x520] sm:$0xff]
    %v341 = vld [vmem:[#allocation5 + $0x528] sm:$0xff]
    %v342 = vld [vmem:[#allocation5 + $0x530] sm:$0xff]
    %v343 = vld [vmem:[#allocation5 + $0x538] sm:$0xff]
    %v344 = vld [vmem:[#allocation5 + $0x540] sm:$0xff]
    %v345 = vld [vmem:[#allocation5 + $0x548] sm:$0xff]
    %v346 = vld [vmem:[#allocation5 + $0x550] sm:$0xff]
    %v347 = vld [vmem:[#allocation5 + $0x558] sm:$0xff]
    %v348 = vld [vmem:[#allocation5 + $0x560] sm:$0xff]
    %v349 = vld [vmem:[#allocation5 + $0x568] sm:$0xff]
    %v350 = vld [vmem:[#allocation5 + $0x570] sm:$0xff]
    %v351 = vld [vmem:[#allocation5 + $0x578] sm:$0xff]
    %v352 = vld [vmem:[#allocation5 + $0x580] sm:$0xff]
    %v353 = vld [vmem:[#allocation5 + $0x588] sm:$0xff]
    %v354 = vld [vmem:[#allocation5 + $0x590] sm:$0xff]
    %v355 = vld [vmem:[#allocation5 + $0x598] sm:$0xff]
    %v356 = vld [vmem:[#allocation5 + $0x5a0] sm:$0xff]
    %v357 = vld [vmem:[#allocation5 + $0x5a8] sm:$0xff]
    %v358 = vld [vmem:[#allocation5 + $0x5b0] sm:$0xff]
    %v359 = vld [vmem:[#allocation5 + $0x5b8] sm:$0xff]
    %v360 = vld [vmem:[#allocation5 + $0x5c0] sm:$0xff]
    %v361 = vld [vmem:[#allocation5 + $0x5c8] sm:$0xff]
    %v362 = vld [vmem:[#allocation5 + $0x5d0] sm:$0xff]
    %v363 = vld [vmem:[#allocation5 + $0x5d8] sm:$0xff]
    %v364 = vld [vmem:[#allocation5 + $0x5e0] sm:$0xff]
    %v365 = vld [vmem:[#allocation5 + $0x5e8] sm:$0xff]
    %v366 = vld [vmem:[#allocation5 + $0x5f0] sm:$0xff]
    %v367 = vld [vmem:[#allocation5 + $0x5f8] sm:$0xff]
    %368 = vmatprep.subr.mxu0 %v177
    %369 = vmatpush1.msra.mxu0 %v176
    %370 = vmatprep.subr.mxu0 %v183
    %371 = vmatpush1.msra.mxu0 %v182
    %372 = vmatprep.subr.mxu0 %v189
    %373 = vmatpush1.msra.mxu0 %v188
    %374 = vmatprep.subr.mxu0 %v195
    %375 = vmatpush1.msra.mxu0 %v194
    %376 = vmatprep.subr.mxu0 %v201
    %377 = vmatpush1.msra.mxu0 %v200
    %378 = vmatprep.subr.mxu0 %v207
    %379 = vmatpush1.msra.mxu0 %v206
    %380 = vmatprep.subr.mxu0 %v213
    %381 = vmatpush1.msra.mxu0 %v212
    %382 = vmatprep.subr.mxu0 %v219
    %383 = vmatpush1.msra.mxu0 %v218
    %384 = vmatprep.subr.mxu0 %v225
    %385 = vmatpush1.msra.mxu0 %v224
    %386 = vmatprep.subr.mxu0 %v231
    %387 = vmatpush1.msra.mxu0 %v230
    %388 = vmatprep.subr.mxu0 %v237
    %389 = vmatpush1.msra.mxu0 %v236
    %390 = vmatprep.subr.mxu0 %v243
    %391 = vmatpush1.msra.mxu0 %v242
    %392 = vmatprep.subr.mxu0 %v249
    %393 = vmatpush1.msra.mxu0 %v248
    %394 = vmatprep.subr.mxu0 %v255
    %395 = vmatpush1.msra.mxu0 %v254
    %396 = vmatprep.subr.mxu0 %v261
    %397 = vmatpush1.msra.mxu0 %v260
    %398 = vmatprep.subr.mxu0 %v267
    %399 = vmatpush1.msra.mxu0 %v266
    %400 = vmatprep.subr.mxu0 %v273
    %401 = vmatpush1.msra.mxu0 %v272
    %402 = vmatprep.subr.mxu0 %v279
    %403 = vmatpush1.msra.mxu0 %v278
    %404 = vmatprep.subr.mxu0 %v285
    %405 = vmatpush1.msra.mxu0 %v284
    %406 = vmatprep.subr.mxu0 %v291
    %407 = vmatpush1.msra.mxu0 %v290
    %408 = vmatprep.subr.mxu0 %v297
    %409 = vmatpush1.msra.mxu0 %v296
    %410 = vmatprep.subr.mxu0 %v303
    %411 = vmatpush1.msra.mxu0 %v302
    %412 = vmatprep.subr.mxu0 %v309
    %413 = vmatpush1.msra.mxu0 %v308
    %414 = vmatprep.subr.mxu0 %v315
    %415 = vmatpush1.msra.mxu0 %v314
    %416 = vmatprep.subr.mxu0 %v321
    %417 = vmatpush1.msra.mxu0 %v320
    %418 = vmatprep.subr.mxu0 %v327
    %419 = vmatpush1.msra.mxu0 %v326
    %420 = vmatprep.subr.mxu0 %v333
    %421 = vmatpush1.msra.mxu0 %v332
    %422 = vmatprep.subr.mxu0 %v339
    %423 = vmatpush1.msra.mxu0 %v338
    %424 = vmatprep.subr.mxu0 %v345
    %425 = vmatpush1.msra.mxu0 %v344
    %426 = vmatprep.subr.mxu0 %v351
    %427 = vmatpush1.msra.mxu0 %v350
    %428 = vmatprep.subr.mxu0 %v357
    %429 = vmatpush1.msra.mxu0 %v356
    %430 = vmatprep.subr.mxu0 %v363
    %431 = vmatpush1.msra.mxu0 %v362
    %432 = vmatprep.mubr.f32.mxu0 %v175
    %433 = vmatmul.mubr.f32.gmra.mrb[0].mxu0 %v174
    %v434 = vpop.f32.mrb[0].mxu0
    %v435 = vadd.f32 0.0, %v434
    %v436 = vpop.f32.mrb[0].mxu0
    %v437 = vadd.f32 0.0, %v436
    %438 = vdwg.mxu0
    %439 = vmatprep.subr.mxu0 %v179
    %440 = vmatpush1.msra.mxu0 %v178
    %441 = vmatprep.subr.mxu0 %v185
    %442 = vmatpush1.msra.mxu0 %v184
    %443 = vmatprep.subr.mxu0 %v191
    %444 = vmatpush1.msra.mxu0 %v190
    %445 = vmatprep.subr.mxu0 %v197
    %446 = vmatpush1.msra.mxu0 %v196
    %447 = vmatprep.subr.mxu0 %v203
    %448 = vmatpush1.msra.mxu0 %v202
    %449 = vmatprep.subr.mxu0 %v209
    %450 = vmatpush1.msra.mxu0 %v208
    %451 = vmatprep.subr.mxu0 %v215
    %452 = vmatpush1.msra.mxu0 %v214
    %453 = vmatprep.subr.mxu0 %v221
    %454 = vmatpush1.msra.mxu0 %v220
    %455 = vmatprep.subr.mxu0 %v227
    %456 = vmatpush1.msra.mxu0 %v226
    %457 = vmatprep.subr.mxu0 %v233
    %458 = vmatpush1.msra.mxu0 %v232
    %459 = vmatprep.subr.mxu0 %v239
    %460 = vmatpush1.msra.mxu0 %v238
    %461 = vmatprep.subr.mxu0 %v245
    %462 = vmatpush1.msra.mxu0 %v244
    %463 = vmatprep.subr.mxu0 %v251
    %464 = vmatpush1.msra.mxu0 %v250
    %465 = vmatprep.subr.mxu0 %v257
    %466 = vmatpush1.msra.mxu0 %v256
    %467 = vmatprep.subr.mxu0 %v263
    %468 = vmatpush1.msra.mxu0 %v262
    %469 = vmatprep.subr.mxu0 %v269
    %470 = vmatpush1.msra.mxu0 %v268
    %471 = vmatprep.subr.mxu0 %v275
    %472 = vmatpush1.msra.mxu0 %v274
    %473 = vmatprep.subr.mxu0 %v281
    %474 = vmatpush1.msra.mxu0 %v280
    %475 = vmatprep.subr.mxu0 %v287
    %476 = vmatpush1.msra.mxu0 %v286
    %477 = vmatprep.subr.mxu0 %v293
    %478 = vmatpush1.msra.mxu0 %v292
    %479 = vmatprep.subr.mxu0 %v299
    %480 = vmatpush1.msra.mxu0 %v298
    %481 = vmatprep.subr.mxu0 %v305
    %482 = vmatpush1.msra.mxu0 %v304
    %483 = vmatprep.subr.mxu0 %v311
    %484 = vmatpush1.msra.mxu0 %v310
    %485 = vmatprep.subr.mxu0 %v317
    %486 = vmatpush1.msra.mxu0 %v316
    %487 = vmatprep.subr.mxu0 %v323
    %488 = vmatpush1.msra.mxu0 %v322
    %489 = vmatprep.subr.mxu0 %v329
    %490 = vmatpush1.msra.mxu0 %v328
    %491 = vmatprep.subr.mxu0 %v335
    %492 = vmatpush1.msra.mxu0 %v334
    %493 = vmatprep.subr.mxu0 %v341
    %494 = vmatpush1.msra.mxu0 %v340
    %495 = vmatprep.subr.mxu0 %v347
    %496 = vmatpush1.msra.mxu0 %v346
    %497 = vmatprep.subr.mxu0 %v353
    %498 = vmatpush1.msra.mxu0 %v352
    %499 = vmatprep.subr.mxu0 %v359
    %500 = vmatpush1.msra.mxu0 %v358
    %501 = vmatprep.subr.mxu0 %v365
    %502 = vmatpush1.msra.mxu0 %v364
    %503 = vmatprep.mubr.f32.mxu0 %v175
    %504 = vmatmul.mubr.f32.gmra.mrb[0].mxu0 %v174
    %v505 = vpop.f32.mrb[0].mxu0
    %v506 = vadd.f32 0.0, %v505
    %v507 = vpop.f32.mrb[0].mxu0
    %v508 = vadd.f32 0.0, %v507
    %509 = vdwg.mxu0
    %510 = vmatprep.subr.mxu0 %v181
    %511 = vmatpush1.msra.mxu0 %v180
    %512 = vmatprep.subr.mxu0 %v187
    %513 = vmatpush1.msra.mxu0 %v186
    %514 = vmatprep.subr.mxu0 %v193
    %515 = vmatpush1.msra.mxu0 %v192
    %516 = vmatprep.subr.mxu0 %v199
    %517 = vmatpush1.msra.mxu0 %v198
    %518 = vmatprep.subr.mxu0 %v205
    %519 = vmatpush1.msra.mxu0 %v204
    %520 = vmatprep.subr.mxu0 %v211
    %521 = vmatpush1.msra.mxu0 %v210
    %522 = vmatprep.subr.mxu0 %v217
    %523 = vmatpush1.msra.mxu0 %v216
    %524 = vmatprep.subr.mxu0 %v223
    %525 = vmatpush1.msra.mxu0 %v222
    %526 = vmatprep.subr.mxu0 %v229
    %527 = vmatpush1.msra.mxu0 %v228
    %528 = vmatprep.subr.mxu0 %v235
    %529 = vmatpush1.msra.mxu0 %v234
    %530 = vmatprep.subr.mxu0 %v241
    %531 = vmatpush1.msra.mxu0 %v240
    %532 = vmatprep.subr.mxu0 %v247
    %533 = vmatpush1.msra.mxu0 %v246
    %534 = vmatprep.subr.mxu0 %v253
    %535 = vmatpush1.msra.mxu0 %v252
    %536 = vmatprep.subr.mxu0 %v259
    %537 = vmatpush1.msra.mxu0 %v258
    %538 = vmatprep.subr.mxu0 %v265
    %539 = vmatpush1.msra.mxu0 %v264
    %540 = vmatprep.subr.mxu0 %v271
    %541 = vmatpush1.msra.mxu0 %v270
    %542 = vmatprep.subr.mxu0 %v277
    %543 = vmatpush1.msra.mxu0 %v276
    %544 = vmatprep.subr.mxu0 %v283
    %545 = vmatpush1.msra.mxu0 %v282
    %546 = vmatprep.subr.mxu0 %v289
    %547 = vmatpush1.msra.mxu0 %v288
    %548 = vmatprep.subr.mxu0 %v295
    %549 = vmatpush1.msra.mxu0 %v294
    %550 = vmatprep.subr.mxu0 %v301
    %551 = vmatpush1.msra.mxu0 %v300
    %552 = vmatprep.subr.mxu0 %v307
    %553 = vmatpush1.msra.mxu0 %v306
    %554 = vmatprep.subr.mxu0 %v313
    %555 = vmatpush1.msra.mxu0 %v312
    %556 = vmatprep.subr.mxu0 %v319
    %557 = vmatpush1.msra.mxu0 %v318
    %558 = vmatprep.subr.mxu0 %v325
    %559 = vmatpush1.msra.mxu0 %v324
    %560 = vmatprep.subr.mxu0 %v331
    %561 = vmatpush1.msra.mxu0 %v330
    %562 = vmatprep.subr.mxu0 %v337
    %563 = vmatpush1.msra.mxu0 %v336
    %564 = vmatprep.subr.mxu0 %v343
    %565 = vmatpush1.msra.mxu0 %v342
    %566 = vmatprep.subr.mxu0 %v349
    %567 = vmatpush1.msra.mxu0 %v348
    %568 = vmatprep.subr.mxu0 %v355
    %569 = vmatpush1.msra.mxu0 %v354
    %570 = vmatprep.subr.mxu0 %v361
    %571 = vmatpush1.msra.mxu0 %v360
    %572 = vmatprep.subr.mxu0 %v367
    %573 = vmatpush1.msra.mxu0 %v366
    %574 = vmatprep.mubr.f32.mxu0 %v175
    %575 = vmatmul.mubr.f32.gmra.mrb[0].mxu0 %v174
    %v576 = vpop.f32.mrb[0].mxu0
    %v577 = vadd.f32 0.0, %v576
    %v578 = vpop.f32.mrb[0].mxu0
    %v579 = vadd.f32 0.0, %v578
    %580 = vdwg.mxu0
    %v581 = vld [vmem:[#allocation7] sm:$0x3f]
    %v583 = vlaneseq
    %v584 = vshrl.u32 %v583, 7
    %v585 = vsub.s32 0, %v584
    %v586 = vrot.slane %v581, %v585
    %v587 = vlaneseq
    %v588 = vshrl.u32 %v587, 7
    %v589 = vsub.s32 1, %v588
    %v590 = vrot.slane %v581, %v589
    %v591 = vlaneseq
    %v592 = vshrl.u32 %v591, 7
    %v593 = vsub.s32 2, %v592
    %v594 = vrot.slane %v581, %v593
    %v595 = vlaneseq
    %v596 = vshrl.u32 %v595, 7
    %v597 = vsub.s32 3, %v596
    %v598 = vrot.slane %v581, %v597
    %v599 = vlaneseq
    %v600 = vshrl.u32 %v599, 7
    %v601 = vsub.s32 4, %v600
    %v602 = vrot.slane %v581, %v601
    %v603 = vlaneseq
    %v604 = vshrl.u32 %v603, 7
    %v605 = vsub.s32 5, %v604
    %v606 = vrot.slane %v581, %v605
    %v613 = vmul.f32 %v435, %v586
    %v614 = vmul.f32 %v437, %v590
    %v615 = vmul.f32 %v506, %v594
    %v616 = vmul.f32 %v508, %v598
    %v617 = vmul.f32 %v577, %v602
    %v618 = vmul.f32 %v579, %v606
    %v619 = vld [vmem:[#allocation8] sm:$0x3f]
    %v621 = vlaneseq
    %v622 = vshrl.u32 %v621, 7
    %v623 = vsub.s32 0, %v622
    %v624 = vrot.slane %v619, %v623
    %v625 = vlaneseq
    %v626 = vshrl.u32 %v625, 7
    %v627 = vsub.s32 1, %v626
    %v628 = vrot.slane %v619, %v627
    %v629 = vlaneseq
    %v630 = vshrl.u32 %v629, 7
    %v631 = vsub.s32 2, %v630
    %v632 = vrot.slane %v619, %v631
    %v633 = vlaneseq
    %v634 = vshrl.u32 %v633, 7
    %v635 = vsub.s32 3, %v634
    %v636 = vrot.slane %v619, %v635
    %v637 = vlaneseq
    %v638 = vshrl.u32 %v637, 7
    %v639 = vsub.s32 4, %v638
    %v640 = vrot.slane %v619, %v639
    %v641 = vlaneseq
    %v642 = vshrl.u32 %v641, 7
    %v643 = vsub.s32 5, %v642
    %v644 = vrot.slane %v619, %v643
    %v651 = vadd.f32 %v613, %v624
    %v652 = vadd.f32 %v614, %v628
    %v653 = vadd.f32 %v615, %v632
    %v654 = vadd.f32 %v616, %v636
    %v655 = vadd.f32 %v617, %v640
    %v656 = vadd.f32 %v618, %v644
    %v657 = vmax.f32 %v651, 0.0
    %v658 = vmax.f32 %v652, 0.0
    %v659 = vmax.f32 %v653, 0.0
    %v660 = vmax.f32 %v654, 0.0
    %v661 = vmax.f32 %v655, 0.0
    %v662 = vmax.f32 %v656, 0.0
    %v663 = vmax.f32 %v657, %v660
    %v664 = vmax.f32 %v658, %v661
    %v665 = vmax.f32 %v659, %v662
    %v666 = vld [vmem:[#allocation10] sm:$0xff]
    %v667 = vld [vmem:[#allocation10 + $0x8] sm:$0xff]
    %v668 = vld [vmem:[#allocation10 + $0x10] sm:$0xff]
    %v669 = vld [vmem:[#allocation10 + $0x18] sm:$0xff]
    %v670 = vld [vmem:[#allocation10 + $0x20] sm:$0xff]
    %v671 = vld [vmem:[#allocation10 + $0x28] sm:$0xff]
    %v672 = vld [vmem:[#allocation10 + $0x30] sm:$0xff]
    %v673 = vld [vmem:[#allocation10 + $0x38] sm:$0xff]
    %v674 = vld [vmem:[#allocation10 + $0x40] sm:$0xff]
    %v675 = vld [vmem:[#allocation10 + $0x48] sm:$0xff]
    %v676 = vld [vmem:[#allocation10 + $0x50] sm:$0xff]
    %v677 = vld [vmem:[#allocation10 + $0x58] sm:$0xff]
    %v678 = vld [vmem:[#allocation10 + $0x60] sm:$0xff]
    %v679 = vld [vmem:[#allocation10 + $0x68] sm:$0xff]
    %v680 = vld [vmem:[#allocation10 + $0x70] sm:$0xff]
    %v681 = vld [vmem:[#allocation10 + $0x78] sm:$0xff]
    %v682 = vld [vmem:[#allocation10 + $0x80] sm:$0xff]
    %v683 = vld [vmem:[#allocation10 + $0x88] sm:$0xff]
    %v684 = vld [vmem:[#allocation10 + $0x90] sm:$0xff]
    %v685 = vld [vmem:[#allocation10 + $0x98] sm:$0xff]
    %v686 = vld [vmem:[#allocation10 + $0xa0] sm:$0xff]
    %v687 = vld [vmem:[#allocation10 + $0xa8] sm:$0xff]
    %v688 = vld [vmem:[#allocation10 + $0xb0] sm:$0xff]
    %v689 = vld [vmem:[#allocation10 + $0xb8] sm:$0xff]
    %v690 = vld [vmem:[#allocation10 + $0xc0] sm:$0xff]
    %v691 = vld [vmem:[#allocation10 + $0xc8] sm:$0xff]
    %v692 = vld [vmem:[#allocation10 + $0xd0] sm:$0xff]
    %v693 = vld [vmem:[#allocation10 + $0xd8] sm:$0xff]
    %v694 = vld [vmem:[#allocation10 + $0xe0] sm:$0xff]
    %v695 = vld [vmem:[#allocation10 + $0xe8] sm:$0xff]
    %v696 = vld [vmem:[#allocation10 + $0xf0] sm:$0xff]
    %v697 = vld [vmem:[#allocation10 + $0xf8] sm:$0xff]
    %v698 = vld [vmem:[#allocation10 + $0x100] sm:$0xff]
    %v699 = vld [vmem:[#allocation10 + $0x108] sm:$0xff]
    %v700 = vld [vmem:[#allocation10 + $0x110] sm:$0xff]
    %v701 = vld [vmem:[#allocation10 + $0x118] sm:$0xff]
    %v702 = vld [vmem:[#allocation10 + $0x120] sm:$0xff]
    %v703 = vld [vmem:[#allocation10 + $0x128] sm:$0xff]
    %v704 = vld [vmem:[#allocation10 + $0x130] sm:$0xff]
    %v705 = vld [vmem:[#allocation10 + $0x138] sm:$0xff]
    %v706 = vld [vmem:[#allocation10 + $0x140] sm:$0xff]
    %v707 = vld [vmem:[#allocation10 + $0x148] sm:$0xff]
    %v708 = vld [vmem:[#allocation10 + $0x150] sm:$0xff]
    %v709 = vld [vmem:[#allocation10 + $0x158] sm:$0xff]
    %v710 = vld [vmem:[#allocation10 + $0x160] sm:$0xff]
    %v711 = vld [vmem:[#allocation10 + $0x168] sm:$0xff]
    %v712 = vld [vmem:[#allocation10 + $0x170] sm:$0xff]
    %v713 = vld [vmem:[#allocation10 + $0x178] sm:$0xff]
    %v714 = vld [vmem:[#allocation10 + $0x180] sm:$0xff]
    %v715 = vld [vmem:[#allocation10 + $0x188] sm:$0xff]
    %v716 = vld [vmem:[#allocation10 + $0x190] sm:$0xff]
    %v717 = vld [vmem:[#allocation10 + $0x198] sm:$0xff]
    %v718 = vld [vmem:[#allocation10 + $0x1a0] sm:$0xff]
    %v719 = vld [vmem:[#allocation10 + $0x1a8] sm:$0xff]
    %v720 = vld [vmem:[#allocation10 + $0x1b0] sm:$0xff]
    %v721 = vld [vmem:[#allocation10 + $0x1b8] sm:$0xff]
    %v722 = vld [vmem:[#allocation10 + $0x1c0] sm:$0xff]
    %v723 = vld [vmem:[#allocation10 + $0x1c8] sm:$0xff]
    %v724 = vld [vmem:[#allocation10 + $0x1d0] sm:$0xff]
    %v725 = vld [vmem:[#allocation10 + $0x1d8] sm:$0xff]
    %v726 = vld [vmem:[#allocation10 + $0x1e0] sm:$0xff]
    %v727 = vld [vmem:[#allocation10 + $0x1e8] sm:$0xff]
    %v728 = vld [vmem:[#allocation10 + $0x1f0] sm:$0xff]
    %v729 = vld [vmem:[#allocation10 + $0x1f8] sm:$0xff]
    %v730 = vld [vmem:[#allocation10 + $0x200] sm:$0xff]
    %v731 = vld [vmem:[#allocation10 + $0x208] sm:$0xff]
    %v732 = vld [vmem:[#allocation10 + $0x210] sm:$0xff]
    %v733 = vld [vmem:[#allocation10 + $0x218] sm:$0xff]
    %v734 = vld [vmem:[#allocation10 + $0x220] sm:$0xff]
    %v735 = vld [vmem:[#allocation10 + $0x228] sm:$0xff]
    %v736 = vld [vmem:[#allocation10 + $0x230] sm:$0xff]
    %v737 = vld [vmem:[#allocation10 + $0x238] sm:$0xff]
    %v738 = vld [vmem:[#allocation10 + $0x240] sm:$0xff]
    %v739 = vld [vmem:[#allocation10 + $0x248] sm:$0xff]
    %v740 = vld [vmem:[#allocation10 + $0x250] sm:$0xff]
    %v741 = vld [vmem:[#allocation10 + $0x258] sm:$0xff]
    %v742 = vld [vmem:[#allocation10 + $0x260] sm:$0xff]
    %v743 = vld [vmem:[#allocation10 + $0x268] sm:$0xff]
    %v744 = vld [vmem:[#allocation10 + $0x270] sm:$0xff]
    %v745 = vld [vmem:[#allocation10 + $0x278] sm:$0xff]
    %v746 = vld [vmem:[#allocation10 + $0x280] sm:$0xff]
    %v747 = vld [vmem:[#allocation10 + $0x288] sm:$0xff]
    %v748 = vld [vmem:[#allocation10 + $0x290] sm:$0xff]
    %v749 = vld [vmem:[#allocation10 + $0x298] sm:$0xff]
    %v750 = vld [vmem:[#allocation10 + $0x2a0] sm:$0xff]
    %v751 = vld [vmem:[#allocation10 + $0x2a8] sm:$0xff]
    %v752 = vld [vmem:[#allocation10 + $0x2b0] sm:$0xff]
    %v753 = vld [vmem:[#allocation10 + $0x2b8] sm:$0xff]
    %v754 = vld [vmem:[#allocation10 + $0x2c0] sm:$0xff]
    %v755 = vld [vmem:[#allocation10 + $0x2c8] sm:$0xff]
    %v756 = vld [vmem:[#allocation10 + $0x2d0] sm:$0xff]
    %v757 = vld [vmem:[#allocation10 + $0x2d8] sm:$0xff]
    %v758 = vld [vmem:[#allocation10 + $0x2e0] sm:$0xff]
    %v759 = vld [vmem:[#allocation10 + $0x2e8] sm:$0xff]
    %v760 = vld [vmem:[#allocation10 + $0x2f0] sm:$0xff]
    %v761 = vld [vmem:[#allocation10 + $0x2f8] sm:$0xff]
    %v762 = vld [vmem:[#allocation10 + $0x300] sm:$0xff]
    %v763 = vld [vmem:[#allocation10 + $0x308] sm:$0xff]
    %v764 = vld [vmem:[#allocation10 + $0x310] sm:$0xff]
    %v765 = vld [vmem:[#allocation10 + $0x318] sm:$0xff]
    %v766 = vld [vmem:[#allocation10 + $0x320] sm:$0xff]
    %v767 = vld [vmem:[#allocation10 + $0x328] sm:$0xff]
    %v768 = vld [vmem:[#allocation10 + $0x330] sm:$0xff]
    %v769 = vld [vmem:[#allocation10 + $0x338] sm:$0xff]
    %v770 = vld [vmem:[#allocation10 + $0x340] sm:$0xff]
    %v771 = vld [vmem:[#allocation10 + $0x348] sm:$0xff]
    %v772 = vld [vmem:[#allocation10 + $0x350] sm:$0xff]
    %v773 = vld [vmem:[#allocation10 + $0x358] sm:$0xff]
    %v774 = vld [vmem:[#allocation10 + $0x360] sm:$0xff]
    %v775 = vld [vmem:[#allocation10 + $0x368] sm:$0xff]
    %v776 = vld [vmem:[#allocation10 + $0x370] sm:$0xff]
    %v777 = vld [vmem:[#allocation10 + $0x378] sm:$0xff]
    %v778 = vld [vmem:[#allocation10 + $0x380] sm:$0xff]
    %v779 = vld [vmem:[#allocation10 + $0x388] sm:$0xff]
    %v780 = vld [vmem:[#allocation10 + $0x390] sm:$0xff]
    %v781 = vld [vmem:[#allocation10 + $0x398] sm:$0xff]
    %v782 = vld [vmem:[#allocation10 + $0x3a0] sm:$0xff]
    %v783 = vld [vmem:[#allocation10 + $0x3a8] sm:$0xff]
    %v784 = vld [vmem:[#allocation10 + $0x3b0] sm:$0xff]
    %v785 = vld [vmem:[#allocation10 + $0x3b8] sm:$0xff]
    %v786 = vld [vmem:[#allocation10 + $0x3c0] sm:$0xff]
    %v787 = vld [vmem:[#allocation10 + $0x3c8] sm:$0xff]
    %v788 = vld [vmem:[#allocation10 + $0x3d0] sm:$0xff]
    %v789 = vld [vmem:[#allocation10 + $0x3d8] sm:$0xff]
    %v790 = vld [vmem:[#allocation10 + $0x3e0] sm:$0xff]
    %v791 = vld [vmem:[#allocation10 + $0x3e8] sm:$0xff]
    %v792 = vld [vmem:[#allocation10 + $0x3f0] sm:$0xff]
    %v793 = vld [vmem:[#allocation10 + $0x3f8] sm:$0xff]
    %v794 = vld [vmem:[#allocation10 + $0x400] sm:$0xff]
    %v795 = vld [vmem:[#allocation10 + $0x408] sm:$0xff]
    %v796 = vld [vmem:[#allocation10 + $0x410] sm:$0xff]
    %v797 = vld [vmem:[#allocation10 + $0x418] sm:$0xff]
    %v798 = vld [vmem:[#allocation10 + $0x420] sm:$0xff]
    %v799 = vld [vmem:[#allocation10 + $0x428] sm:$0xff]
    %v800 = vld [vmem:[#allocation10 + $0x430] sm:$0xff]
    %v801 = vld [vmem:[#allocation10 + $0x438] sm:$0xff]
    %v802 = vld [vmem:[#allocation10 + $0x440] sm:$0xff]
    %v803 = vld [vmem:[#allocation10 + $0x448] sm:$0xff]
    %v804 = vld [vmem:[#allocation10 + $0x450] sm:$0xff]
    %v805 = vld [vmem:[#allocation10 + $0x458] sm:$0xff]
    %v806 = vld [vmem:[#allocation10 + $0x460] sm:$0xff]
    %v807 = vld [vmem:[#allocation10 + $0x468] sm:$0xff]
    %v808 = vld [vmem:[#allocation10 + $0x470] sm:$0xff]
    %v809 = vld [vmem:[#allocation10 + $0x478] sm:$0xff]
    %v810 = vld [vmem:[#allocation10 + $0x480] sm:$0xff]
    %v811 = vld [vmem:[#allocation10 + $0x488] sm:$0xff]
    %v812 = vld [vmem:[#allocation10 + $0x490] sm:$0xff]
    %v813 = vld [vmem:[#allocation10 + $0x498] sm:$0xff]
    %v814 = vld [vmem:[#allocation10 + $0x4a0] sm:$0xff]
    %v815 = vld [vmem:[#allocation10 + $0x4a8] sm:$0xff]
    %v816 = vld [vmem:[#allocation10 + $0x4b0] sm:$0xff]
    %v817 = vld [vmem:[#allocation10 + $0x4b8] sm:$0xff]
    %v818 = vld [vmem:[#allocation10 + $0x4c0] sm:$0xff]
    %v819 = vld [vmem:[#allocation10 + $0x4c8] sm:$0xff]
    %v820 = vld [vmem:[#allocation10 + $0x4d0] sm:$0xff]
    %v821 = vld [vmem:[#allocation10 + $0x4d8] sm:$0xff]
    %v822 = vld [vmem:[#allocation10 + $0x4e0] sm:$0xff]
    %v823 = vld [vmem:[#allocation10 + $0x4e8] sm:$0xff]
    %v824 = vld [vmem:[#allocation10 + $0x4f0] sm:$0xff]
    %v825 = vld [vmem:[#allocation10 + $0x4f8] sm:$0xff]
    %v826 = vld [vmem:[#allocation10 + $0x500] sm:$0xff]
    %v827 = vld [vmem:[#allocation10 + $0x508] sm:$0xff]
    %v828 = vld [vmem:[#allocation10 + $0x510] sm:$0xff]
    %v829 = vld [vmem:[#allocation10 + $0x518] sm:$0xff]
    %v830 = vld [vmem:[#allocation10 + $0x520] sm:$0xff]
    %v831 = vld [vmem:[#allocation10 + $0x528] sm:$0xff]
    %v832 = vld [vmem:[#allocation10 + $0x530] sm:$0xff]
    %v833 = vld [vmem:[#allocation10 + $0x538] sm:$0xff]
    %v834 = vld [vmem:[#allocation10 + $0x540] sm:$0xff]
    %v835 = vld [vmem:[#allocation10 + $0x548] sm:$0xff]
    %v836 = vld [vmem:[#allocation10 + $0x550] sm:$0xff]
    %v837 = vld [vmem:[#allocation10 + $0x558] sm:$0xff]
    %v838 = vld [vmem:[#allocation10 + $0x560] sm:$0xff]
    %v839 = vld [vmem:[#allocation10 + $0x568] sm:$0xff]
    %v840 = vld [vmem:[#allocation10 + $0x570] sm:$0xff]
    %v841 = vld [vmem:[#allocation10 + $0x578] sm:$0xff]
    %v842 = vld [vmem:[#allocation10 + $0x580] sm:$0xff]
    %v843 = vld [vmem:[#allocation10 + $0x588] sm:$0xff]
    %v844 = vld [vmem:[#allocation10 + $0x590] sm:$0xff]
    %v845 = vld [vmem:[#allocation10 + $0x598] sm:$0xff]
    %v846 = vld [vmem:[#allocation10 + $0x5a0] sm:$0xff]
    %v847 = vld [vmem:[#allocation10 + $0x5a8] sm:$0xff]
    %v848 = vld [vmem:[#allocation10 + $0x5b0] sm:$0xff]
    %v849 = vld [vmem:[#allocation10 + $0x5b8] sm:$0xff]
    %v850 = vld [vmem:[#allocation10 + $0x5c0] sm:$0xff]
    %v851 = vld [vmem:[#allocation10 + $0x5c8] sm:$0xff]
    %v852 = vld [vmem:[#allocation10 + $0x5d0] sm:$0xff]
    %v853 = vld [vmem:[#allocation10 + $0x5d8] sm:$0xff]
    %v854 = vld [vmem:[#allocation10 + $0x5e0] sm:$0xff]
    %v855 = vld [vmem:[#allocation10 + $0x5e8] sm:$0xff]
    %v856 = vld [vmem:[#allocation10 + $0x5f0] sm:$0xff]
    %v857 = vld [vmem:[#allocation10 + $0x5f8] sm:$0xff]
    %v858 = vld [vmem:[#allocation10 + $0x600] sm:$0xff]
    %v859 = vld [vmem:[#allocation10 + $0x608] sm:$0xff]
    %v860 = vld [vmem:[#allocation10 + $0x610] sm:$0xff]
    %v861 = vld [vmem:[#allocation10 + $0x618] sm:$0xff]
    %v862 = vld [vmem:[#allocation10 + $0x620] sm:$0xff]
    %v863 = vld [vmem:[#allocation10 + $0x628] sm:$0xff]
    %v864 = vld [vmem:[#allocation10 + $0x630] sm:$0xff]
    %v865 = vld [vmem:[#allocation10 + $0x638] sm:$0xff]
    %v866 = vld [vmem:[#allocation10 + $0x640] sm:$0xff]
    %v867 = vld [vmem:[#allocation10 + $0x648] sm:$0xff]
    %v868 = vld [vmem:[#allocation10 + $0x650] sm:$0xff]
    %v869 = vld [vmem:[#allocation10 + $0x658] sm:$0xff]
    %v870 = vld [vmem:[#allocation10 + $0x660] sm:$0xff]
    %v871 = vld [vmem:[#allocation10 + $0x668] sm:$0xff]
    %v872 = vld [vmem:[#allocation10 + $0x670] sm:$0xff]
    %v873 = vld [vmem:[#allocation10 + $0x678] sm:$0xff]
    %v874 = vld [vmem:[#allocation10 + $0x680] sm:$0xff]
    %v875 = vld [vmem:[#allocation10 + $0x688] sm:$0xff]
    %v876 = vld [vmem:[#allocation10 + $0x690] sm:$0xff]
    %v877 = vld [vmem:[#allocation10 + $0x698] sm:$0xff]
    %v878 = vld [vmem:[#allocation10 + $0x6a0] sm:$0xff]
    %v879 = vld [vmem:[#allocation10 + $0x6a8] sm:$0xff]
    %v880 = vld [vmem:[#allocation10 + $0x6b0] sm:$0xff]
    %v881 = vld [vmem:[#allocation10 + $0x6b8] sm:$0xff]
    %v882 = vld [vmem:[#allocation10 + $0x6c0] sm:$0xff]
    %v883 = vld [vmem:[#allocation10 + $0x6c8] sm:$0xff]
    %v884 = vld [vmem:[#allocation10 + $0x6d0] sm:$0xff]
    %v885 = vld [vmem:[#allocation10 + $0x6d8] sm:$0xff]
    %v886 = vld [vmem:[#allocation10 + $0x6e0] sm:$0xff]
    %v887 = vld [vmem:[#allocation10 + $0x6e8] sm:$0xff]
    %v888 = vld [vmem:[#allocation10 + $0x6f0] sm:$0xff]
    %v889 = vld [vmem:[#allocation10 + $0x6f8] sm:$0xff]
    %v890 = vld [vmem:[#allocation10 + $0x700] sm:$0xff]
    %v891 = vld [vmem:[#allocation10 + $0x708] sm:$0xff]
    %v892 = vld [vmem:[#allocation10 + $0x710] sm:$0xff]
    %v893 = vld [vmem:[#allocation10 + $0x718] sm:$0xff]
    %v894 = vld [vmem:[#allocation10 + $0x720] sm:$0xff]
    %v895 = vld [vmem:[#allocation10 + $0x728] sm:$0xff]
    %v896 = vld [vmem:[#allocation10 + $0x730] sm:$0xff]
    %v897 = vld [vmem:[#allocation10 + $0x738] sm:$0xff]
    %v898 = vld [vmem:[#allocation10 + $0x740] sm:$0xff]
    %v899 = vld [vmem:[#allocation10 + $0x748] sm:$0xff]
    %v900 = vld [vmem:[#allocation10 + $0x750] sm:$0xff]
    %v901 = vld [vmem:[#allocation10 + $0x758] sm:$0xff]
    %v902 = vld [vmem:[#allocation10 + $0x760] sm:$0xff]
    %v903 = vld [vmem:[#allocation10 + $0x768] sm:$0xff]
    %v904 = vld [vmem:[#allocation10 + $0x770] sm:$0xff]
    %v905 = vld [vmem:[#allocation10 + $0x778] sm:$0xff]
    %v906 = vld [vmem:[#allocation10 + $0x780] sm:$0xff]
    %v907 = vld [vmem:[#allocation10 + $0x788] sm:$0xff]
    %v908 = vld [vmem:[#allocation10 + $0x790] sm:$0xff]
    %v909 = vld [vmem:[#allocation10 + $0x798] sm:$0xff]
    %v910 = vld [vmem:[#allocation10 + $0x7a0] sm:$0xff]
    %v911 = vld [vmem:[#allocation10 + $0x7a8] sm:$0xff]
    %v912 = vld [vmem:[#allocation10 + $0x7b0] sm:$0xff]
    %v913 = vld [vmem:[#allocation10 + $0x7b8] sm:$0xff]
    %v914 = vld [vmem:[#allocation10 + $0x7c0] sm:$0xff]
    %v915 = vld [vmem:[#allocation10 + $0x7c8] sm:$0xff]
    %v916 = vld [vmem:[#allocation10 + $0x7d0] sm:$0xff]
    %v917 = vld [vmem:[#allocation10 + $0x7d8] sm:$0xff]
    %v918 = vld [vmem:[#allocation10 + $0x7e0] sm:$0xff]
    %v919 = vld [vmem:[#allocation10 + $0x7e8] sm:$0xff]
    %v920 = vld [vmem:[#allocation10 + $0x7f0] sm:$0xff]
    %v921 = vld [vmem:[#allocation10 + $0x7f8] sm:$0xff]
    %v922 = vld [vmem:[#allocation10 + $0x800] sm:$0xff]
    %v923 = vld [vmem:[#allocation10 + $0x808] sm:$0xff]
    %v924 = vld [vmem:[#allocation10 + $0x810] sm:$0xff]
    %v925 = vld [vmem:[#allocation10 + $0x818] sm:$0xff]
    %v926 = vld [vmem:[#allocation10 + $0x820] sm:$0xff]
    %v927 = vld [vmem:[#allocation10 + $0x828] sm:$0xff]
    %v928 = vld [vmem:[#allocation10 + $0x830] sm:$0xff]
    %v929 = vld [vmem:[#allocation10 + $0x838] sm:$0xff]
    %v930 = vld [vmem:[#allocation10 + $0x840] sm:$0xff]
    %v931 = vld [vmem:[#allocation10 + $0x848] sm:$0xff]
    %v932 = vld [vmem:[#allocation10 + $0x850] sm:$0xff]
    %v933 = vld [vmem:[#allocation10 + $0x858] sm:$0xff]
    %v934 = vld [vmem:[#allocation10 + $0x860] sm:$0xff]
    %v935 = vld [vmem:[#allocation10 + $0x868] sm:$0xff]
    %v936 = vld [vmem:[#allocation10 + $0x870] sm:$0xff]
    %v937 = vld [vmem:[#allocation10 + $0x878] sm:$0xff]
    %v938 = vld [vmem:[#allocation10 + $0x880] sm:$0xff]
    %v939 = vld [vmem:[#allocation10 + $0x888] sm:$0xff]
    %v940 = vld [vmem:[#allocation10 + $0x890] sm:$0xff]
    %v941 = vld [vmem:[#allocation10 + $0x898] sm:$0xff]
    %v942 = vld [vmem:[#allocation10 + $0x8a0] sm:$0xff]
    %v943 = vld [vmem:[#allocation10 + $0x8a8] sm:$0xff]
    %v944 = vld [vmem:[#allocation10 + $0x8b0] sm:$0xff]
    %v945 = vld [vmem:[#allocation10 + $0x8b8] sm:$0xff]
    %v946 = vld [vmem:[#allocation10 + $0x8c0] sm:$0xff]
    %v947 = vld [vmem:[#allocation10 + $0x8c8] sm:$0xff]
    %v948 = vld [vmem:[#allocation10 + $0x8d0] sm:$0xff]
    %v949 = vld [vmem:[#allocation10 + $0x8d8] sm:$0xff]
    %v950 = vld [vmem:[#allocation10 + $0x8e0] sm:$0xff]
    %v951 = vld [vmem:[#allocation10 + $0x8e8] sm:$0xff]
    %v952 = vld [vmem:[#allocation10 + $0x8f0] sm:$0xff]
    %v953 = vld [vmem:[#allocation10 + $0x8f8] sm:$0xff]
    %954 = vmatprep.subr.mxu0 %v667
    %955 = vmatpush1.msra.mxu0 %v666
    %956 = vmatprep.subr.mxu0 %v673
    %957 = vmatpush1.msra.mxu0 %v672
    %958 = vmatprep.subr.mxu0 %v679
    %959 = vmatpush1.msra.mxu0 %v678
    %960 = vmatprep.subr.mxu0 %v685
    %961 = vmatpush1.msra.mxu0 %v684
    %962 = vmatprep.subr.mxu0 %v691
    %963 = vmatpush1.msra.mxu0 %v690
    %964 = vmatprep.subr.mxu0 %v697
    %965 = vmatpush1.msra.mxu0 %v696
    %966 = vmatprep.subr.mxu0 %v703
    %967 = vmatpush1.msra.mxu0 %v702
    %968 = vmatprep.subr.mxu0 %v709
    %969 = vmatpush1.msra.mxu0 %v708
    %970 = vmatprep.subr.mxu0 %v715
    %971 = vmatpush1.msra.mxu0 %v714
    %972 = vmatprep.subr.mxu0 %v721
    %973 = vmatpush1.msra.mxu0 %v720
    %974 = vmatprep.subr.mxu0 %v727
    %975 = vmatpush1.msra.mxu0 %v726
    %976 = vmatprep.subr.mxu0 %v733
    %977 = vmatpush1.msra.mxu0 %v732
    %978 = vmatprep.subr.mxu0 %v739
    %979 = vmatpush1.msra.mxu0 %v738
    %980 = vmatprep.subr.mxu0 %v745
    %981 = vmatpush1.msra.mxu0 %v744
    %982 = vmatprep.subr.mxu0 %v751
    %983 = vmatpush1.msra.mxu0 %v750
    %984 = vmatprep.subr.mxu0 %v757
    %985 = vmatpush1.msra.mxu0 %v756
    %986 = vmatprep.subr.mxu0 %v763
    %987 = vmatpush1.msra.mxu0 %v762
    %988 = vmatprep.subr.mxu0 %v769
    %989 = vmatpush1.msra.mxu0 %v768
    %990 = vmatprep.subr.mxu0 %v775
    %991 = vmatpush1.msra.mxu0 %v774
    %992 = vmatprep.subr.mxu0 %v781
    %993 = vmatpush1.msra.mxu0 %v780
    %994 = vmatprep.subr.mxu0 %v787
    %995 = vmatpush1.msra.mxu0 %v786
    %996 = vmatprep.subr.mxu0 %v793
    %997 = vmatpush1.msra.mxu0 %v792
    %998 = vmatprep.subr.mxu0 %v799
    %999 = vmatpush1.msra.mxu0 %v798
    %1000 = vmatprep.subr.mxu0 %v805
    %1001 = vmatpush1.msra.mxu0 %v804
    %1002 = vmatprep.subr.mxu0 %v811
    %1003 = vmatpush1.msra.mxu0 %v810
    %1004 = vmatprep.subr.mxu0 %v817
    %1005 = vmatpush1.msra.mxu0 %v816
    %1006 = vmatprep.subr.mxu0 %v823
    %1007 = vmatpush1.msra.mxu0 %v822
    %1008 = vmatprep.subr.mxu0 %v829
    %1009 = vmatpush1.msra.mxu0 %v828
    %1010 = vmatprep.subr.mxu0 %v835
    %1011 = vmatpush1.msra.mxu0 %v834
    %1012 = vmatprep.subr.mxu0 %v841
    %1013 = vmatpush1.msra.mxu0 %v840
    %1014 = vmatprep.subr.mxu0 %v847
    %1015 = vmatpush1.msra.mxu0 %v846
    %1016 = vmatprep.subr.mxu0 %v853
    %1017 = vmatpush1.msra.mxu0 %v852
    %1018 = vmatprep.mubr.f32.mxu0 %v664
    %1019 = vmatmul.mubr.f32.gmra.mrb[0].mxu0 %v663
    %v1020 = vpop.f32.mrb[0].mxu0
    %v1021 = vadd.f32 0.0, %v1020
    %v1022 = vpop.f32.mrb[0].mxu0
    %v1023 = vadd.f32 0.0, %v1022
    %1024 = vdwg.mxu0
    %1025 = vmatprep.subr.mxu0 %v859
    %1026 = vmatpush1.msra.mxu0 %v858
    %1027 = vmatprep.subr.mxu0 %v865
    %1028 = vmatpush1.msra.mxu0 %v864
    %1029 = vmatprep.subr.mxu0 %v871
    %1030 = vmatpush1.msra.mxu0 %v870
    %1031 = vmatprep.subr.mxu0 %v877
    %1032 = vmatpush1.msra.mxu0 %v876
    %1033 = vmatprep.subr.mxu0 %v883
    %1034 = vmatpush1.msra.mxu0 %v882
    %1035 = vmatprep.subr.mxu0 %v889
    %1036 = vmatpush1.msra.mxu0 %v888
    %1037 = vmatprep.subr.mxu0 %v895
    %1038 = vmatpush1.msra.mxu0 %v894
    %1039 = vmatprep.subr.mxu0 %v901
    %1040 = vmatpush1.msra.mxu0 %v900
    %1041 = vmatprep.subr.mxu0 %v907
    %1042 = vmatpush1.msra.mxu0 %v906
    %1043 = vmatprep.subr.mxu0 %v913
    %1044 = vmatpush1.msra.mxu0 %v912
    %1045 = vmatprep.subr.mxu0 %v919
    %1046 = vmatpush1.msra.mxu0 %v918
    %1047 = vmatprep.subr.mxu0 %v925
    %1048 = vmatpush1.msra.mxu0 %v924
    %1049 = vmatprep.subr.mxu0 %v931
    %1050 = vmatpush1.msra.mxu0 %v930
    %1051 = vmatprep.subr.mxu0 %v937
    %1052 = vmatpush1.msra.mxu0 %v936
    %1053 = vmatprep.subr.mxu0 %v943
    %1054 = vmatpush1.msra.mxu0 %v942
    %1055 = vmatprep.subr.mxu0 %v949
    %1056 = vmatpush1.msra.mxu0 %v948
    %1057 = vmatprep.subr.mxu0 0.0
    %1058 = vmatpush1.msra.mxu0 0.0
    %1059 = vmatprep.subr.mxu0 0.0
    %1060 = vmatpush1.msra.mxu0 0.0
    %1061 = vmatprep.subr.mxu0 0.0
    %1062 = vmatpush1.msra.mxu0 0.0
    %1063 = vmatprep.subr.mxu0 0.0
    %1064 = vmatpush1.msra.mxu0 0.0
    %1065 = vmatprep.subr.mxu0 0.0
    %1066 = vmatpush1.msra.mxu0 0.0
    %1067 = vmatprep.subr.mxu0 0.0
    %1068 = vmatpush1.msra.mxu0 0.0
    %1069 = vmatprep.subr.mxu0 0.0
    %1070 = vmatpush1.msra.mxu0 0.0
    %1071 = vmatprep.subr.mxu0 0.0
    %1072 = vmatpush1.msra.mxu0 0.0
    %1073 = vmatprep.subr.mxu0 0.0
    %1074 = vmatpush1.msra.mxu0 0.0
    %1075 = vmatprep.subr.mxu0 0.0
    %1076 = vmatpush1.msra.mxu0 0.0
    %1077 = vmatprep.subr.mxu0 0.0
    %1078 = vmatpush1.msra.mxu0 0.0
    %1079 = vmatprep.subr.mxu0 0.0
    %1080 = vmatpush1.msra.mxu0 0.0
    %1081 = vmatprep.subr.mxu0 0.0
    %1082 = vmatpush1.msra.mxu0 0.0
    %1083 = vmatprep.subr.mxu0 0.0
    %1084 = vmatpush1.msra.mxu0 0.0
    %1085 = vmatprep.subr.mxu0 0.0
    %1086 = vmatpush1.msra.mxu0 0.0
    %1087 = vmatprep.subr.mxu0 0.0
    %1088 = vmatpush1.msra.mxu0 0.0
    %1089 = vmatprep.mubr.f32.mxu0 0.0
    %1090 = vmatmul.mubr.f32.gmra.mrb[0].mxu0 %v665
    %v1091 = vpop.f32.mrb[0].mxu0
    %v1092 = vadd.f32 %v1021, %v1091
    %v1093 = vpop.f32.mrb[0].mxu0
    %v1094 = vadd.f32 %v1023, %v1093
    %1095 = vdwg.mxu0
    %1096 = vmatprep.subr.mxu0 %v669
    %1097 = vmatpush1.msra.mxu0 %v668
    %1098 = vmatprep.subr.mxu0 %v675
    %1099 = vmatpush1.msra.mxu0 %v674
    %1100 = vmatprep.subr.mxu0 %v681
    %1101 = vmatpush1.msra.mxu0 %v680
    %1102 = vmatprep.subr.mxu0 %v687
    %1103 = vmatpush1.msra.mxu0 %v686
    %1104 = vmatprep.subr.mxu0 %v693
    %1105 = vmatpush1.msra.mxu0 %v692
    %1106 = vmatprep.subr.mxu0 %v699
    %1107 = vmatpush1.msra.mxu0 %v698
    %1108 = vmatprep.subr.mxu0 %v705
    %1109 = vmatpush1.msra.mxu0 %v704
    %1110 = vmatprep.subr.mxu0 %v711
    %1111 = vmatpush1.msra.mxu0 %v710
    %1112 = vmatprep.subr.mxu0 %v717
    %1113 = vmatpush1.msra.mxu0 %v716
    %1114 = vmatprep.subr.mxu0 %v723
    %1115 = vmatpush1.msra.mxu0 %v722
    %1116 = vmatprep.subr.mxu0 %v729
    %1117 = vmatpush1.msra.mxu0 %v728
    %1118 = vmatprep.subr.mxu0 %v735
    %1119 = vmatpush1.msra.mxu0 %v734
    %1120 = vmatprep.subr.mxu0 %v741
    %1121 = vmatpush1.msra.mxu0 %v740
    %1122 = vmatprep.subr.mxu0 %v747
    %1123 = vmatpush1.msra.mxu0 %v746
    %1124 = vmatprep.subr.mxu0 %v753
    %1125 = vmatpush1.msra.mxu0 %v752
    %1126 = vmatprep.subr.mxu0 %v759
    %1127 = vmatpush1.msra.mxu0 %v758
    %1128 = vmatprep.subr.mxu0 %v765
    %1129 = vmatpush1.msra.mxu0 %v764
    %1130 = vmatprep.subr.mxu0 %v771
    %1131 = vmatpush1.msra.mxu0 %v770
    %1132 = vmatprep.subr.mxu0 %v777
    %1133 = vmatpush1.msra.mxu0 %v776
    %1134 = vmatprep.subr.mxu0 %v783
    %1135 = vmatpush1.msra.mxu0 %v782
    %1136 = vmatprep.subr.mxu0 %v789
    %1137 = vmatpush1.msra.mxu0 %v788
    %1138 = vmatprep.subr.mxu0 %v795
    %1139 = vmatpush1.msra.mxu0 %v794
    %1140 = vmatprep.subr.mxu0 %v801
    %1141 = vmatpush1.msra.mxu0 %v800
    %1142 = vmatprep.subr.mxu0 %v807
    %1143 = vmatpush1.msra.mxu0 %v806
    %1144 = vmatprep.subr.mxu0 %v813
    %1145 = vmatpush1.msra.mxu0 %v812
    %1146 = vmatprep.subr.mxu0 %v819
    %1147 = vmatpush1.msra.mxu0 %v818
    %1148 = vmatprep.subr.mxu0 %v825
    %1149 = vmatpush1.msra.mxu0 %v824
    %1150 = vmatprep.subr.mxu0 %v831
    %1151 = vmatpush1.msra.mxu0 %v830
    %1152 = vmatprep.subr.mxu0 %v837
    %1153 = vmatpush1.msra.mxu0 %v836
    %1154 = vmatprep.subr.mxu0 %v843
    %1155 = vmatpush1.msra.mxu0 %v842
    %1156 = vmatprep.subr.mxu0 %v849
    %1157 = vmatpush1.msra.mxu0 %v848
    %1158 = vmatprep.subr.mxu0 %v855
    %1159 = vmatpush1.msra.mxu0 %v854
    %1160 = vmatprep.mubr.f32.mxu0 %v664
    %1161 = vmatmul.mubr.f32.gmra.mrb[0].mxu0 %v663
    %v1162 = vpop.f32.mrb[0].mxu0
    %v1163 = vadd.f32 0.0, %v1162
    %v1164 = vpop.f32.mrb[0].mxu0
    %v1165 = vadd.f32 0.0, %v1164
    %1166 = vdwg.mxu0
    %1167 = vmatprep.subr.mxu0 %v861
    %1168 = vmatpush1.msra.mxu0 %v860
    %1169 = vmatprep.subr.mxu0 %v867
    %1170 = vmatpush1.msra.mxu0 %v866
    %1171 = vmatprep.subr.mxu0 %v873
    %1172 = vmatpush1.msra.mxu0 %v872
    %1173 = vmatprep.subr.mxu0 %v879
    %1174 = vmatpush1.msra.mxu0 %v878
    %1175 = vmatprep.subr.mxu0 %v885
    %1176 = vmatpush1.msra.mxu0 %v884
    %1177 = vmatprep.subr.mxu0 %v891
    %1178 = vmatpush1.msra.mxu0 %v890
    %1179 = vmatprep.subr.mxu0 %v897
    %1180 = vmatpush1.msra.mxu0 %v896
    %1181 = vmatprep.subr.mxu0 %v903
    %1182 = vmatpush1.msra.mxu0 %v902
    %1183 = vmatprep.subr.mxu0 %v909
    %1184 = vmatpush1.msra.mxu0 %v908
    %1185 = vmatprep.subr.mxu0 %v915
    %1186 = vmatpush1.msra.mxu0 %v914
    %1187 = vmatprep.subr.mxu0 %v921
    %1188 = vmatpush1.msra.mxu0 %v920
    %1189 = vmatprep.subr.mxu0 %v927
    %1190 = vmatpush1.msra.mxu0 %v926
    %1191 = vmatprep.subr.mxu0 %v933
    %1192 = vmatpush1.msra.mxu0 %v932
    %1193 = vmatprep.subr.mxu0 %v939
    %1194 = vmatpush1.msra.mxu0 %v938
    %1195 = vmatprep.subr.mxu0 %v945
    %1196 = vmatpush1.msra.mxu0 %v944
    %1197 = vmatprep.subr.mxu0 %v951
    %1198 = vmatpush1.msra.mxu0 %v950
    %1199 = vmatprep.subr.mxu0 0.0
    %1200 = vmatpush1.msra.mxu0 0.0
    %1201 = vmatprep.subr.mxu0 0.0
    %1202 = vmatpush1.msra.mxu0 0.0
    %1203 = vmatprep.subr.mxu0 0.0
    %1204 = vmatpush1.msra.mxu0 0.0
    %1205 = vmatprep.subr.mxu0 0.0
    %1206 = vmatpush1.msra.mxu0 0.0
    %1207 = vmatprep.subr.mxu0 0.0
    %1208 = vmatpush1.msra.mxu0 0.0
    %1209 = vmatprep.subr.mxu0 0.0
    %1210 = vmatpush1.msra.mxu0 0.0
    %1211 = vmatprep.subr.mxu0 0.0
    %1212 = vmatpush1.msra.mxu0 0.0
    %1213 = vmatprep.subr.mxu0 0.0
    %1214 = vmatpush1.msra.mxu0 0.0
    %1215 = vmatprep.subr.mxu0 0.0
    %1216 = vmatpush1.msra.mxu0 0.0
    %1217 = vmatprep.subr.mxu0 0.0
    %1218 = vmatpush1.msra.mxu0 0.0
    %1219 = vmatprep.subr.mxu0 0.0
    %1220 = vmatpush1.msra.mxu0 0.0
    %1221 = vmatprep.subr.mxu0 0.0
    %1222 = vmatpush1.msra.mxu0 0.0
    %1223 = vmatprep.subr.mxu0 0.0
    %1224 = vmatpush1.msra.mxu0 0.0
    %1225 = vmatprep.subr.mxu0 0.0
    %1226 = vmatpush1.msra.mxu0 0.0
    %1227 = vmatprep.subr.mxu0 0.0
    %1228 = vmatpush1.msra.mxu0 0.0
    %1229 = vmatprep.subr.mxu0 0.0
    %1230 = vmatpush1.msra.mxu0 0.0
    %1231 = vmatprep.mubr.f32.mxu0 0.0
    %1232 = vmatmul.mubr.f32.gmra.mrb[0].mxu0 %v665
    %v1233 = vpop.f32.mrb[0].mxu0
    %v1234 = vadd.f32 %v1163, %v1233
    %v1235 = vpop.f32.mrb[0].mxu0
    %v1236 = vadd.f32 %v1165, %v1235
    %1237 = vdwg.mxu0
    %1238 = vmatprep.subr.mxu0 %v671
    %1239 = vmatpush1.msra.mxu0 %v670
    %1240 = vmatprep.subr.mxu0 %v677
    %1241 = vmatpush1.msra.mxu0 %v676
    %1242 = vmatprep.subr.mxu0 %v683
    %1243 = vmatpush1.msra.mxu0 %v682
    %1244 = vmatprep.subr.mxu0 %v689
    %1245 = vmatpush1.msra.mxu0 %v688
    %1246 = vmatprep.subr.mxu0 %v695
    %1247 = vmatpush1.msra.mxu0 %v694
    %1248 = vmatprep.subr.mxu0 %v701
    %1249 = vmatpush1.msra.mxu0 %v700
    %1250 = vmatprep.subr.mxu0 %v707
    %1251 = vmatpush1.msra.mxu0 %v706
    %1252 = vmatprep.subr.mxu0 %v713
    %1253 = vmatpush1.msra.mxu0 %v712
    %1254 = vmatprep.subr.mxu0 %v719
    %1255 = vmatpush1.msra.mxu0 %v718
    %1256 = vmatprep.subr.mxu0 %v725
    %1257 = vmatpush1.msra.mxu0 %v724
    %1258 = vmatprep.subr.mxu0 %v731
    %1259 = vmatpush1.msra.mxu0 %v730
    %1260 = vmatprep.subr.mxu0 %v737
    %1261 = vmatpush1.msra.mxu0 %v736
    %1262 = vmatprep.subr.mxu0 %v743
    %1263 = vmatpush1.msra.mxu0 %v742
    %1264 = vmatprep.subr.mxu0 %v749
    %1265 = vmatpush1.msra.mxu0 %v748
    %1266 = vmatprep.subr.mxu0 %v755
    %1267 = vmatpush1.msra.mxu0 %v754
    %1268 = vmatprep.subr.mxu0 %v761
    %1269 = vmatpush1.msra.mxu0 %v760
    %1270 = vmatprep.subr.mxu0 %v767
    %1271 = vmatpush1.msra.mxu0 %v766
    %1272 = vmatprep.subr.mxu0 %v773
    %1273 = vmatpush1.msra.mxu0 %v772
    %1274 = vmatprep.subr.mxu0 %v779
    %1275 = vmatpush1.msra.mxu0 %v778
    %1276 = vmatprep.subr.mxu0 %v785
    %1277 = vmatpush1.msra.mxu0 %v784
    %1278 = vmatprep.subr.mxu0 %v791
    %1279 = vmatpush1.msra.mxu0 %v790
    %1280 = vmatprep.subr.mxu0 %v797
    %1281 = vmatpush1.msra.mxu0 %v796
    %1282 = vmatprep.subr.mxu0 %v803
    %1283 = vmatpush1.msra.mxu0 %v802
    %1284 = vmatprep.subr.mxu0 %v809
    %1285 = vmatpush1.msra.mxu0 %v808
    %1286 = vmatprep.subr.mxu0 %v815
    %1287 = vmatpush1.msra.mxu0 %v814
    %1288 = vmatprep.subr.mxu0 %v821
    %1289 = vmatpush1.msra.mxu0 %v820
    %1290 = vmatprep.subr.mxu0 %v827
    %1291 = vmatpush1.msra.mxu0 %v826
    %1292 = vmatprep.subr.mxu0 %v833
    %1293 = vmatpush1.msra.mxu0 %v832
    %1294 = vmatprep.subr.mxu0 %v839
    %1295 = vmatpush1.msra.mxu0 %v838
    %1296 = vmatprep.subr.mxu0 %v845
    %1297 = vmatpush1.msra.mxu0 %v844
    %1298 = vmatprep.subr.mxu0 %v851
    %1299 = vmatpush1.msra.mxu0 %v850
    %1300 = vmatprep.subr.mxu0 %v857
    %1301 = vmatpush1.msra.mxu0 %v856
    %1302 = vmatprep.mubr.f32.mxu0 %v664
    %1303 = vmatmul.mubr.f32.gmra.mrb[0].mxu0 %v663
    %v1304 = vpop.f32.mrb[0].mxu0
    %v1305 = vadd.f32 0.0, %v1304
    %v1306 = vpop.f32.mrb[0].mxu0
    %v1307 = vadd.f32 0.0, %v1306
    %1308 = vdwg.mxu0
    %1309 = vmatprep.subr.mxu0 %v863
    %1310 = vmatpush1.msra.mxu0 %v862
    %1311 = vmatprep.subr.mxu0 %v869
    %1312 = vmatpush1.msra.mxu0 %v868
    %1313 = vmatprep.subr.mxu0 %v875
    %1314 = vmatpush1.msra.mxu0 %v874
    %1315 = vmatprep.subr.mxu0 %v881
    %1316 = vmatpush1.msra.mxu0 %v880
    %1317 = vmatprep.subr.mxu0 %v887
    %1318 = vmatpush1.msra.mxu0 %v886
    %1319 = vmatprep.subr.mxu0 %v893
    %1320 = vmatpush1.msra.mxu0 %v892
    %1321 = vmatprep.subr.mxu0 %v899
    %1322 = vmatpush1.msra.mxu0 %v898
    %1323 = vmatprep.subr.mxu0 %v905
    %1324 = vmatpush1.msra.mxu0 %v904
    %1325 = vmatprep.subr.mxu0 %v911
    %1326 = vmatpush1.msra.mxu0 %v910
    %1327 = vmatprep.subr.mxu0 %v917
    %1328 = vmatpush1.msra.mxu0 %v916
    %1329 = vmatprep.subr.mxu0 %v923
    %1330 = vmatpush1.msra.mxu0 %v922
    %1331 = vmatprep.subr.mxu0 %v929
    %1332 = vmatpush1.msra.mxu0 %v928
    %1333 = vmatprep.subr.mxu0 %v935
    %1334 = vmatpush1.msra.mxu0 %v934
    %1335 = vmatprep.subr.mxu0 %v941
    %1336 = vmatpush1.msra.mxu0 %v940
    %1337 = vmatprep.subr.mxu0 %v947
    %1338 = vmatpush1.msra.mxu0 %v946
    %1339 = vmatprep.subr.mxu0 %v953
    %1340 = vmatpush1.msra.mxu0 %v952
    %1341 = vmatprep.subr.mxu0 0.0
    %1342 = vmatpush1.msra.mxu0 0.0
    %1343 = vmatprep.subr.mxu0 0.0
    %1344 = vmatpush1.msra.mxu0 0.0
    %1345 = vmatprep.subr.mxu0 0.0
    %1346 = vmatpush1.msra.mxu0 0.0
    %1347 = vmatprep.subr.mxu0 0.0
    %1348 = vmatpush1.msra.mxu0 0.0
    %1349 = vmatprep.subr.mxu0 0.0
    %1350 = vmatpush1.msra.mxu0 0.0
    %1351 = vmatprep.subr.mxu0 0.0
    %1352 = vmatpush1.msra.mxu0 0.0
    %1353 = vmatprep.subr.mxu0 0.0
    %1354 = vmatpush1.msra.mxu0 0.0
    %1355 = vmatprep.subr.mxu0 0.0
    %1356 = vmatpush1.msra.mxu0 0.0
    %1357 = vmatprep.subr.mxu0 0.0
    %1358 = vmatpush1.msra.mxu0 0.0
    %1359 = vmatprep.subr.mxu0 0.0
    %1360 = vmatpush1.msra.mxu0 0.0
    %1361 = vmatprep.subr.mxu0 0.0
    %1362 = vmatpush1.msra.mxu0 0.0
    %1363 = vmatprep.subr.mxu0 0.0
    %1364 = vmatpush1.msra.mxu0 0.0
    %1365 = vmatprep.subr.mxu0 0.0
    %1366 = vmatpush1.msra.mxu0 0.0
    %1367 = vmatprep.subr.mxu0 0.0
    %1368 = vmatpush1.msra.mxu0 0.0
    %1369 = vmatprep.subr.mxu0 0.0
    %1370 = vmatpush1.msra.mxu0 0.0
    %1371 = vmatprep.subr.mxu0 0.0
    %1372 = vmatpush1.msra.mxu0 0.0
    %1373 = vmatprep.mubr.f32.mxu0 0.0
    %1374 = vmatmul.mubr.f32.gmra.mrb[0].mxu0 %v665
    %v1375 = vpop.f32.mrb[0].mxu0
    %v1376 = vadd.f32 %v1305, %v1375
    %v1377 = vpop.f32.mrb[0].mxu0
    %v1378 = vadd.f32 %v1307, %v1377
    %1379 = vdwg.mxu0
    %v1380 = vld [vmem:[#allocation11] sm:$0x3f]
    %v1382 = vlaneseq
    %v1383 = vshrl.u32 %v1382, 7
    %v1384 = vsub.s32 0, %v1383
    %v1385 = vrot.slane %v1380, %v1384
    %v1386 = vlaneseq
    %v1387 = vshrl.u32 %v1386, 7
    %v1388 = vsub.s32 1, %v1387
    %v1389 = vrot.slane %v1380, %v1388
    %v1390 = vlaneseq
    %v1391 = vshrl.u32 %v1390, 7
    %v1392 = vsub.s32 2, %v1391
    %v1393 = vrot.slane %v1380, %v1392
    %v1394 = vlaneseq
    %v1395 = vshrl.u32 %v1394, 7
    %v1396 = vsub.s32 3, %v1395
    %v1397 = vrot.slane %v1380, %v1396
    %v1398 = vlaneseq
    %v1399 = vshrl.u32 %v1398, 7
    %v1400 = vsub.s32 4, %v1399
    %v1401 = vrot.slane %v1380, %v1400
    %v1402 = vlaneseq
    %v1403 = vshrl.u32 %v1402, 7
    %v1404 = vsub.s32 5, %v1403
    %v1405 = vrot.slane %v1380, %v1404
    %v1412 = vmul.f32 %v1092, %v1385
    %v1413 = vmul.f32 %v1094, %v1389
    %v1414 = vmul.f32 %v1234, %v1393
    %v1415 = vmul.f32 %v1236, %v1397
    %v1416 = vmul.f32 %v1376, %v1401
    %v1417 = vmul.f32 %v1378, %v1405
    %v1418 = vld [vmem:[#allocation13] sm:$0x3f]
    %v1420 = vlaneseq
    %v1421 = vshrl.u32 %v1420, 7
    %v1422 = vsub.s32 0, %v1421
    %v1423 = vrot.slane %v1418, %v1422
    %v1424 = vlaneseq
    %v1425 = vshrl.u32 %v1424, 7
    %v1426 = vsub.s32 1, %v1425
    %v1427 = vrot.slane %v1418, %v1426
    %v1428 = vlaneseq
    %v1429 = vshrl.u32 %v1428, 7
    %v1430 = vsub.s32 2, %v1429
    %v1431 = vrot.slane %v1418, %v1430
    %v1432 = vlaneseq
    %v1433 = vshrl.u32 %v1432, 7
    %v1434 = vsub.s32 3, %v1433
    %v1435 = vrot.slane %v1418, %v1434
    %v1436 = vlaneseq
    %v1437 = vshrl.u32 %v1436, 7
    %v1438 = vsub.s32 4, %v1437
    %v1439 = vrot.slane %v1418, %v1438
    %v1440 = vlaneseq
    %v1441 = vshrl.u32 %v1440, 7
    %v1442 = vsub.s32 5, %v1441
    %v1443 = vrot.slane %v1418, %v1442
    %v1450 = vadd.f32 %v1412, %v1423
    %v1451 = vadd.f32 %v1413, %v1427
    %v1452 = vadd.f32 %v1414, %v1431
    %v1453 = vadd.f32 %v1415, %v1435
    %v1454 = vadd.f32 %v1416, %v1439
    %v1455 = vadd.f32 %v1417, %v1443
    %v1456 = vmax.f32 %v1450, 0.0
    %v1457 = vmax.f32 %v1451, 0.0
    %v1458 = vmax.f32 %v1452, 0.0
    %v1459 = vmax.f32 %v1453, 0.0
    %v1460 = vmax.f32 %v1454, 0.0
    %v1461 = vmax.f32 %v1455, 0.0
    %v1462 = vmax.f32 %v1456, %v1459
    %v1463 = vmax.f32 %v1457, %v1460
    %v1464 = vmax.f32 %v1458, %v1461
    %v1465 = vld [vmem:[#allocation14] sm:$0xff]
    %v1466 = vld [vmem:[#allocation14 + $0x8] sm:$0xff]
    %v1467 = vld [vmem:[#allocation14 + $0x10] sm:$0xff]
    %v1468 = vld [vmem:[#allocation14 + $0x18] sm:$0xff]
    %v1469 = vld [vmem:[#allocation14 + $0x20] sm:$0xff]
    %v1470 = vld [vmem:[#allocation14 + $0x28] sm:$0xff]
    %v1471 = vld [vmem:[#allocation14 + $0x30] sm:$0xff]
    %v1472 = vld [vmem:[#allocation14 + $0x38] sm:$0xff]
    %v1473 = vld [vmem:[#allocation14 + $0x40] sm:$0xff]
    %v1474 = vld [vmem:[#allocation14 + $0x48] sm:$0xff]
    %v1475 = vld [vmem:[#allocation14 + $0x50] sm:$0xff]
    %v1476 = vld [vmem:[#allocation14 + $0x58] sm:$0xff]
    %v1477 = vld [vmem:[#allocation14 + $0x60] sm:$0xff]
    %v1478 = vld [vmem:[#allocation14 + $0x68] sm:$0xff]
    %v1479 = vld [vmem:[#allocation14 + $0x70] sm:$0xff]
    %v1480 = vld [vmem:[#allocation14 + $0x78] sm:$0xff]
    %v1481 = vld [vmem:[#allocation14 + $0x80] sm:$0xff]
    %v1482 = vld [vmem:[#allocation14 + $0x88] sm:$0xff]
    %v1483 = vld [vmem:[#allocation14 + $0x90] sm:$0xff]
    %v1484 = vld [vmem:[#allocation14 + $0x98] sm:$0xff]
    %v1485 = vld [vmem:[#allocation14 + $0xa0] sm:$0xff]
    %v1486 = vld [vmem:[#allocation14 + $0xa8] sm:$0xff]
    %v1487 = vld [vmem:[#allocation14 + $0xb0] sm:$0xff]
    %v1488 = vld [vmem:[#allocation14 + $0xb8] sm:$0xff]
    %v1489 = vld [vmem:[#allocation14 + $0xc0] sm:$0xff]
    %v1490 = vld [vmem:[#allocation14 + $0xc8] sm:$0xff]
    %v1491 = vld [vmem:[#allocation14 + $0xd0] sm:$0xff]
    %v1492 = vld [vmem:[#allocation14 + $0xd8] sm:$0xff]
    %v1493 = vld [vmem:[#allocation14 + $0xe0] sm:$0xff]
    %v1494 = vld [vmem:[#allocation14 + $0xe8] sm:$0xff]
    %v1495 = vld [vmem:[#allocation14 + $0xf0] sm:$0xff]
    %v1496 = vld [vmem:[#allocation14 + $0xf8] sm:$0xff]
    %v1497 = vld [vmem:[#allocation14 + $0x100] sm:$0xff]
    %v1498 = vld [vmem:[#allocation14 + $0x108] sm:$0xff]
    %v1499 = vld [vmem:[#allocation14 + $0x110] sm:$0xff]
    %v1500 = vld [vmem:[#allocation14 + $0x118] sm:$0xff]
    %v1501 = vld [vmem:[#allocation14 + $0x120] sm:$0xff]
    %v1502 = vld [vmem:[#allocation14 + $0x128] sm:$0xff]
    %v1503 = vld [vmem:[#allocation14 + $0x130] sm:$0xff]
    %v1504 = vld [vmem:[#allocation14 + $0x138] sm:$0xff]
    %v1505 = vld [vmem:[#allocation14 + $0x140] sm:$0xff]
    %v1506 = vld [vmem:[#allocation14 + $0x148] sm:$0xff]
    %v1507 = vld [vmem:[#allocation14 + $0x150] sm:$0xff]
    %v1508 = vld [vmem:[#allocation14 + $0x158] sm:$0xff]
    %v1509 = vld [vmem:[#allocation14 + $0x160] sm:$0xff]
    %v1510 = vld [vmem:[#allocation14 + $0x168] sm:$0xff]
    %v1511 = vld [vmem:[#allocation14 + $0x170] sm:$0xff]
    %v1512 = vld [vmem:[#allocation14 + $0x178] sm:$0xff]
    %v1513 = vld [vmem:[#allocation16] sm:$0x1]
    %v1515 = vlaneseq
    %v1516 = vshrl.u32 %v1515, 7
    %v1517 = vsub.s32 0, %v1516
    %v1518 = vrot.slane %v1513, %v1517
    %1520 = vmatprep.subr.mxu0 0.0
    %1521 = vmatpush1.msra.mxu0 %v1465
    %1522 = vmatprep.subr.mxu0 0.0
    %1523 = vmatpush1.msra.mxu0 %v1466
    %1524 = vmatprep.subr.mxu0 0.0
    %1525 = vmatpush1.msra.mxu0 %v1467
    %1526 = vmatprep.subr.mxu0 0.0
    %1527 = vmatpush1.msra.mxu0 %v1468
    %1528 = vmatprep.subr.mxu0 0.0
    %1529 = vmatpush1.msra.mxu0 %v1469
    %1530 = vmatprep.subr.mxu0 0.0
    %1531 = vmatpush1.msra.mxu0 %v1470
    %1532 = vmatprep.subr.mxu0 0.0
    %1533 = vmatpush1.msra.mxu0 %v1471
    %1534 = vmatprep.subr.mxu0 0.0
    %1535 = vmatpush1.msra.mxu0 %v1472
    %1536 = vmatprep.subr.mxu0 0.0
    %1537 = vmatpush1.msra.mxu0 %v1473
    %1538 = vmatprep.subr.mxu0 0.0
    %1539 = vmatpush1.msra.mxu0 %v1474
    %1540 = vmatprep.subr.mxu0 0.0
    %1541 = vmatpush1.msra.mxu0 %v1475
    %1542 = vmatprep.subr.mxu0 0.0
    %1543 = vmatpush1.msra.mxu0 %v1476
    %1544 = vmatprep.subr.mxu0 0.0
    %1545 = vmatpush1.msra.mxu0 %v1477
    %1546 = vmatprep.subr.mxu0 0.0
    %1547 = vmatpush1.msra.mxu0 %v1478
    %1548 = vmatprep.subr.mxu0 0.0
    %1549 = vmatpush1.msra.mxu0 %v1479
    %1550 = vmatprep.subr.mxu0 0.0
    %1551 = vmatpush1.msra.mxu0 %v1480
    %1552 = vmatprep.subr.mxu0 0.0
    %1553 = vmatpush1.msra.mxu0 %v1481
    %1554 = vmatprep.subr.mxu0 0.0
    %1555 = vmatpush1.msra.mxu0 %v1482
    %1556 = vmatprep.subr.mxu0 0.0
    %1557 = vmatpush1.msra.mxu0 %v1483
    %1558 = vmatprep.subr.mxu0 0.0
    %1559 = vmatpush1.msra.mxu0 %v1484
    %1560 = vmatprep.subr.mxu0 0.0
    %1561 = vmatpush1.msra.mxu0 %v1485
    %1562 = vmatprep.subr.mxu0 0.0
    %1563 = vmatpush1.msra.mxu0 %v1486
    %1564 = vmatprep.subr.mxu0 0.0
    %1565 = vmatpush1.msra.mxu0 %v1487
    %1566 = vmatprep.subr.mxu0 0.0
    %1567 = vmatpush1.msra.mxu0 %v1488
    %1568 = vmatprep.subr.mxu0 0.0
    %1569 = vmatpush1.msra.mxu0 %v1489
    %1570 = vmatprep.subr.mxu0 0.0
    %1571 = vmatpush1.msra.mxu0 %v1490
    %1572 = vmatprep.subr.mxu0 0.0
    %1573 = vmatpush1.msra.mxu0 %v1491
    %1574 = vmatprep.subr.mxu0 0.0
    %1575 = vmatpush1.msra.mxu0 %v1492
    %1576 = vmatprep.subr.mxu0 0.0
    %1577 = vmatpush1.msra.mxu0 %v1493
    %1578 = vmatprep.subr.mxu0 0.0
    %1579 = vmatpush1.msra.mxu0 %v1494
    %1580 = vmatprep.subr.mxu0 0.0
    %1581 = vmatpush1.msra.mxu0 %v1495
    %1582 = vmatprep.subr.mxu0 0.0
    %1583 = vmatpush1.msra.mxu0 %v1496
    %1584 = vmatprep.mubr.f32.mxu0 %v1463
    %1585 = vmatmul.mubr.f32.gmra.mrb[0].mxu0 %v1462
    %v1586 = vpop.f32.mrb[0].mxu0
    %v1587 = vadd.f32 %v1518, %v1586
    %v1588 = vpop.f32.mrb[0].mxu0
    %1589 = vdwg.mxu0
    %1590 = vmatprep.subr.mxu0 0.0
    %1591 = vmatpush1.msra.mxu0 %v1497
    %1592 = vmatprep.subr.mxu0 0.0
    %1593 = vmatpush1.msra.mxu0 %v1498
    %1594 = vmatprep.subr.mxu0 0.0
    %1595 = vmatpush1.msra.mxu0 %v1499
    %1596 = vmatprep.subr.mxu0 0.0
    %1597 = vmatpush1.msra.mxu0 %v1500
    %1598 = vmatprep.subr.mxu0 0.0
    %1599 = vmatpush1.msra.mxu0 %v1501
    %1600 = vmatprep.subr.mxu0 0.0
    %1601 = vmatpush1.msra.mxu0 %v1502
    %1602 = vmatprep.subr.mxu0 0.0
    %1603 = vmatpush1.msra.mxu0 %v1503
    %1604 = vmatprep.subr.mxu0 0.0
    %1605 = vmatpush1.msra.mxu0 %v1504
    %1606 = vmatprep.subr.mxu0 0.0
    %1607 = vmatpush1.msra.mxu0 %v1505
    %1608 = vmatprep.subr.mxu0 0.0
    %1609 = vmatpush1.msra.mxu0 %v1506
    %1610 = vmatprep.subr.mxu0 0.0
    %1611 = vmatpush1.msra.mxu0 %v1507
    %1612 = vmatprep.subr.mxu0 0.0
    %1613 = vmatpush1.msra.mxu0 %v1508
    %1614 = vmatprep.subr.mxu0 0.0
    %1615 = vmatpush1.msra.mxu0 %v1509
    %1616 = vmatprep.subr.mxu0 0.0
    %1617 = vmatpush1.msra.mxu0 %v1510
    %1618 = vmatprep.subr.mxu0 0.0
    %1619 = vmatpush1.msra.mxu0 %v1511
    %1620 = vmatprep.subr.mxu0 0.0
    %1621 = vmatpush1.msra.mxu0 %v1512
    %1622 = vmatprep.subr.mxu0 0.0
    %1623 = vmatpush1.msra.mxu0 0.0
    %1624 = vmatprep.subr.mxu0 0.0
    %1625 = vmatpush1.msra.mxu0 0.0
    %1626 = vmatprep.subr.mxu0 0.0
    %1627 = vmatpush1.msra.mxu0 0.0
    %1628 = vmatprep.subr.mxu0 0.0
    %1629 = vmatpush1.msra.mxu0 0.0
    %1630 = vmatprep.subr.mxu0 0.0
    %1631 = vmatpush1.msra.mxu0 0.0
    %1632 = vmatprep.subr.mxu0 0.0
    %1633 = vmatpush1.msra.mxu0 0.0
    %1634 = vmatprep.subr.mxu0 0.0
    %1635 = vmatpush1.msra.mxu0 0.0
    %1636 = vmatprep.subr.mxu0 0.0
    %1637 = vmatpush1.msra.mxu0 0.0
    %1638 = vmatprep.subr.mxu0 0.0
    %1639 = vmatpush1.msra.mxu0 0.0
    %1640 = vmatprep.subr.mxu0 0.0
    %1641 = vmatpush1.msra.mxu0 0.0
    %1642 = vmatprep.subr.mxu0 0.0
    %1643 = vmatpush1.msra.mxu0 0.0
    %1644 = vmatprep.subr.mxu0 0.0
    %1645 = vmatpush1.msra.mxu0 0.0
    %1646 = vmatprep.subr.mxu0 0.0
    %1647 = vmatpush1.msra.mxu0 0.0
    %1648 = vmatprep.subr.mxu0 0.0
    %1649 = vmatpush1.msra.mxu0 0.0
    %1650 = vmatprep.subr.mxu0 0.0
    %1651 = vmatpush1.msra.mxu0 0.0
    %1652 = vmatprep.subr.mxu0 0.0
    %1653 = vmatpush1.msra.mxu0 0.0
    %1654 = vmatprep.mubr.f32.mxu0 0.0
    %1655 = vmatmul.mubr.f32.gmra.mrb[0].mxu0 %v1464
    %v1656 = vpop.f32.mrb[0].mxu0
    %v1657 = vadd.f32 %v1587, %v1656
    %v1658 = vpop.f32.mrb[0].mxu0
    %1659 = vdwg.mxu0
    %v1660 = vmax.f32 %v1657, 0.0
    %v1661 = vld [vmem:[#allocation17] sm:$0xff]
    %v1662 = vld [vmem:[#allocation17 + $0x8] sm:$0xff]
    %v1663 = vld [vmem:[#allocation17 + $0x10] sm:$0xff]
    %v1664 = vld [vmem:[#allocation17 + $0x18] sm:$0xff]
    %v1665 = vld [vmem:[#allocation17 + $0x20] sm:$0xff]
    %v1666 = vld [vmem:[#allocation17 + $0x28] sm:$0xff]
    %v1667 = vld [vmem:[#allocation17 + $0x30] sm:$0xff]
    %v1668 = vld [vmem:[#allocation17 + $0x38] sm:$0xff]
    %v1669 = vld [vmem:[#allocation17 + $0x40] sm:$0xff]
    %v1670 = vld [vmem:[#allocation17 + $0x48] sm:$0xff]
    %v1671 = vld [vmem:[#allocation17 + $0x50] sm:$0xff]
    %v1672 = vld [vmem:[#allocation17 + $0x58] sm:$0xff]
    %v1673 = vld [vmem:[#allocation17 + $0x60] sm:$0xff]
    %v1674 = vld [vmem:[#allocation17 + $0x68] sm:$0xff]
    %v1675 = vld [vmem:[#allocation17 + $0x70] sm:$0xff]
    %v1676 = vld [vmem:[#allocation17 + $0x78] sm:$0xff]
    %v1677 = vld [vmem:[#allocation19] sm:$0x1]
    %v1679 = vlaneseq
    %v1680 = vshrl.u32 %v1679, 7
    %v1681 = vsub.s32 0, %v1680
    %v1682 = vrot.slane %v1677, %v1681
    %1684 = vmatprep.subr.mxu0 0.0
    %1685 = vmatpush1.msra.mxu0 %v1661
    %1686 = vmatprep.subr.mxu0 0.0
    %1687 = vmatpush1.msra.mxu0 %v1662
    %1688 = vmatprep.subr.mxu0 0.0
    %1689 = vmatpush1.msra.mxu0 %v1663
    %1690 = vmatprep.subr.mxu0 0.0
    %1691 = vmatpush1.msra.mxu0 %v1664
    %1692 = vmatprep.subr.mxu0 0.0
    %1693 = vmatpush1.msra.mxu0 %v1665
    %1694 = vmatprep.subr.mxu0 0.0
    %1695 = vmatpush1.msra.mxu0 %v1666
    %1696 = vmatprep.subr.mxu0 0.0
    %1697 = vmatpush1.msra.mxu0 %v1667
    %1698 = vmatprep.subr.mxu0 0.0
    %1699 = vmatpush1.msra.mxu0 %v1668
    %1700 = vmatprep.subr.mxu0 0.0
    %1701 = vmatpush1.msra.mxu0 %v1669
    %1702 = vmatprep.subr.mxu0 0.0
    %1703 = vmatpush1.msra.mxu0 %v1670
    %1704 = vmatprep.subr.mxu0 0.0
    %1705 = vmatpush1.msra.mxu0 %v1671
    %1706 = vmatprep.subr.mxu0 0.0
    %1707 = vmatpush1.msra.mxu0 %v1672
    %1708 = vmatprep.subr.mxu0 0.0
    %1709 = vmatpush1.msra.mxu0 %v1673
    %1710 = vmatprep.subr.mxu0 0.0
    %1711 = vmatpush1.msra.mxu0 %v1674
    %1712 = vmatprep.subr.mxu0 0.0
    %1713 = vmatpush1.msra.mxu0 %v1675
    %1714 = vmatprep.subr.mxu0 0.0
    %1715 = vmatpush1.msra.mxu0 %v1676
    %1716 = vmatprep.subr.mxu0 0.0
    %1717 = vmatpush1.msra.mxu0 0.0
    %1718 = vmatprep.subr.mxu0 0.0
    %1719 = vmatpush1.msra.mxu0 0.0
    %1720 = vmatprep.subr.mxu0 0.0
    %1721 = vmatpush1.msra.mxu0 0.0
    %1722 = vmatprep.subr.mxu0 0.0
    %1723 = vmatpush1.msra.mxu0 0.0
    %1724 = vmatprep.subr.mxu0 0.0
    %1725 = vmatpush1.msra.mxu0 0.0
    %1726 = vmatprep.subr.mxu0 0.0
    %1727 = vmatpush1.msra.mxu0 0.0
    %1728 = vmatprep.subr.mxu0 0.0
    %1729 = vmatpush1.msra.mxu0 0.0
    %1730 = vmatprep.subr.mxu0 0.0
    %1731 = vmatpush1.msra.mxu0 0.0
    %1732 = vmatprep.subr.mxu0 0.0
    %1733 = vmatpush1.msra.mxu0 0.0
    %1734 = vmatprep.subr.mxu0 0.0
    %1735 = vmatpush1.msra.mxu0 0.0
    %1736 = vmatprep.subr.mxu0 0.0
    %1737 = vmatpush1.msra.mxu0 0.0
    %1738 = vmatprep.subr.mxu0 0.0
    %1739 = vmatpush1.msra.mxu0 0.0
    %1740 = vmatprep.subr.mxu0 0.0
    %1741 = vmatpush1.msra.mxu0 0.0
    %1742 = vmatprep.subr.mxu0 0.0
    %1743 = vmatpush1.msra.mxu0 0.0
    %1744 = vmatprep.subr.mxu0 0.0
    %1745 = vmatpush1.msra.mxu0 0.0
    %1746 = vmatprep.subr.mxu0 0.0
    %1747 = vmatpush1.msra.mxu0 0.0
    %1748 = vmatprep.mubr.f32.mxu0 0.0
    %1749 = vmatmul.mubr.f32.gmra.mrb[0].mxu0 %v1660
    %v1750 = vpop.f32.mrb[0].mxu0
    %v1751 = vadd.f32 %v1682, %v1750
    %v1752 = vpop.f32.mrb[0].mxu0
    %1753 = vdwg.mxu0
    %1754 = vst [vmem:[#allocation20] sm:$0xff] %v1751
    // Predicated region
    $region90: #{tpu_custom_call.1} parent=1 // pred_check
      _
    $region91: #{tpu_custom_call.1} parent=1 // pred_check_branch
      %1756 = sbr.rel (0) target = $region93
    $region92: #{tpu_custom_call.1} parent=1 // pred_region
      %s1758 = ssub.s32 128, 128
      %1759 = vsyncadd [#allocation4], %s1758
      %s1761 = sshll.u32 [#allocation20], 4
      %s1762 = int_to_ptr.vmem [resolvable:$true] %s1761
      %1764 = dma.vmem_to_hbm [thread:$0]  %s1762, 128, %s11, [#allocation4]
    $region93: #{tpu_custom_call.1} parent=1 // pred_fallthru
      _
    // Predicated region
    $region94: #{tpu_custom_call.1} parent=1 // pred_check
      _
    $region95: #{tpu_custom_call.1} parent=1 // pred_check_branch
      %1766 = sbr.rel (0) target = $region97
    $region96: #{tpu_custom_call.1} parent=1 // pred_region
      %1767 = dma.done [#allocation4], 128
    $region97: #{tpu_custom_call.1} parent=1 // pred_fallthru
      _
    %1768 = vsyncpa [#allocation3], 1
    %1769 = vsyncpa [#allocation6], 1
    %1770 = vsyncpa [#allocation9], 1
    %1771 = vsyncpa [#allocation12], 1
    %1772 = vsyncpa [#allocation15], 1
    %1773 = vsyncpa [#allocation18], 1
    %1774 = vsyncpa [#allocation4], 1

</llo_original>
